<compile_context>
chip_gen: v7x
topology: tpu7x:2x2x1
jax: 0.10.0
libtpu: 0.0.40
codegen_flags: <defaults>
</compile_context>

<pallas_src>
import functools

import jax
import jax.numpy as jnp
from jax import lax
from jax.experimental import pallas as pl
from jax.experimental.pallas import tpu as pltpu


# ---------------------------------------------------------------------------
# CycleFC shift pattern (matches CycleFC.shiftlist in the PyTorch reference).
# ---------------------------------------------------------------------------
def shift_list(pad, hidden_dim):
    x_shift = list(range(-pad, pad + 1))
    x_r_shift = list(range(pad - 1, -pad, -1))
    xl = x_shift + x_r_shift
    n = hidden_dim // len(xl) + 1
    return (xl * n)[:hidden_dim]


def _round_up(x, m):
    return ((x + m - 1) // m) * m


# ---------------------------------------------------------------------------
# Pallas kernel: one batch element per grid step, whole image resident.
# ---------------------------------------------------------------------------
def _cycle_block_kernel(x_ref, cs_ref, wbig_ref, bbig_ref,
                        wr1_ref, br1_ref, wr2_ref, br2_ref,
                        o_ref, *, H, W, Cp, distinct_shifts):
    f32 = jnp.float32
    HW = H * W
    dt = x_ref.dtype                       # f32 or bf16 (compute dtype for MXU)

    # ---- load image, build CycleFC vertical shift in-kernel -----------------
    x2 = x_ref[0].astype(f32)              # (HW, Cp)
    cs = cs_ref[...]                       # (1, Cp) int32: per-channel H shift
    r_idx = lax.broadcasted_iota(jnp.int32, (HW, 1), 0)

    xs2 = jnp.zeros_like(x2)
    for s in distinct_shifts:              # static Python loop (<= 2*pad+1 shifts)
        rolled = x2 if s == 0 else jnp.roll(x2, s * W, axis=0)
        # output row h valid iff 0 <= h - s < H  <=>  s*W <= r < (H+s)*W
        row_ok = ((r_idx >= s * W) & (r_idx < (H + s) * W)).astype(f32)
        chan_ok = (cs == s).astype(f32)
        xs2 = xs2 + rolled * row_ok * chan_ok

    # Fused LHS: [shifted | unshifted] -> one 2*Cp-deep MXU contraction below.
    lhs = jnp.concatenate([xs2, x2], axis=1).astype(dt)        # (HW, 2*Cp)

    # ---- weights (packed: rows [Wh^T ; Wc^T ; Wp^T]) -------------------------
    whf = wbig_ref[0:Cp, :].astype(f32)                        # proj_h  (in, out)
    wcf = wbig_ref[Cp:2 * Cp, :].astype(f32)                   # proj_c
    b_h = bbig_ref[0:1, :]
    b_c = bbig_ref[1:2, :]
    b_p = bbig_ref[2:3, :]

    # ---- reweight path from per-image column means (linearity of the mean) --
    ones = jnp.full((1, HW), 1.0 / HW, dtype=dt)               # fold 1/HW in
    means = jnp.dot(ones, lhs, preferred_element_type=f32)     # (1, 2*Cp) on MXU
    mean_xh = jnp.dot(means[:, :Cp], whf, preferred_element_type=f32) + b_h
    mean_xc = jnp.dot(means[:, Cp:], wcf, preferred_element_type=f32) + b_c
    a = 2.0 * mean_xh + mean_xc                                # x_w == x_h

    h1 = jnp.dot(a, wr1_ref[...], preferred_element_type=f32) + br1_ref[...]
    h1 = 0.5 * h1 * (1.0 + lax.erf(h1 * 0.7071067811865476))   # exact GELU
    z = jnp.dot(h1, wr2_ref[...], preferred_element_type=f32) + br2_ref[...]

    # z is (1, 3*Cp) laid out [branch0 | branch1 | branch2]; softmax over branches.
    z0 = z[:, 0:Cp]
    z1 = z[:, Cp:2 * Cp]
    z2 = z[:, 2 * Cp:3 * Cp]
    m = jnp.maximum(jnp.maximum(z0, z1), z2)
    e0 = jnp.exp(z0 - m)
    e1 = jnp.exp(z1 - m)
    e2 = jnp.exp(z2 - m)
    inv = pl.reciprocal(e0 + e1 + e2, approx=True)             # EUP slot
    w01 = (e0 + e1) * inv                                      # weight on x_h (==x_w)
    w2 = e2 * inv                                              # weight on x_c

    # ---- fold softmax weights into the branch weight columns & biases -------
    w_fold = jnp.concatenate([whf * w01, wcf * w2], axis=0).astype(dt)  # (2Cp, Cp)
    b_fold = b_h * w01 + b_c * w2                                       # (1, Cp)

    y = jnp.dot(lhs, w_fold, preferred_element_type=f32) + b_fold       # (HW, Cp)
    out = jnp.dot(y.astype(dt), wbig_ref[2 * Cp:3 * Cp, :],
                  preferred_element_type=f32) + b_p
    o_ref[...] = out.reshape(1, HW, Cp).astype(o_ref.dtype)


# ---------------------------------------------------------------------------
# Wrapper: channel padding, weight packing/permutation, pallas_call.
# ---------------------------------------------------------------------------
def cycle_block_pallas(x, params, shift_size=5, use_bf16=False):
    """x: (B, H, W, C) float32, NHWC. Returns (B, H, W, C) float32."""
    B, H, W, C = x.shape
    pad = shift_size // 2
    shifts = shift_list(pad, C)
    distinct_shifts = tuple(sorted(set(shifts)))

    LANE = 128
    Cp = _round_up(C, LANE)                       # lane-dense channel dim
    Cr = params["W_r1"].shape[0]                  # C // 4
    Crp = _round_up(Cr, LANE)

    def pad2(a, rows, cols):
        return jnp.pad(a, ((0, rows - a.shape[0]), (0, cols - a.shape[1])))

    # --- activations: pad channels, (optionally) cast, flatten spatial -------
    xr = x
    if Cp != C:
        xr = jnp.pad(xr, ((0, 0), (0, 0), (0, 0), (0, Cp - C)))
    if use_bf16:
        xr = xr.astype(jnp.bfloat16)
    xr = xr.reshape(B, H * W, Cp)

    # per-channel shift assignment (padded channels get 0; they are zero anyway)
    chan_shift = jnp.array(shifts + [0] * (Cp - C), dtype=jnp.int32).reshape(1, Cp)

    # --- big weights packed into one array: rows [Wh^T ; Wc^T ; Wp^T] --------
    wh_t = pad2(params["W_h"].T, Cp, Cp)
    wc_t = pad2(params["W_c"].T, Cp, Cp)
    wp_t = pad2(params["W_p"].T, Cp, Cp)
    w_big = jnp.concatenate([wh_t, wc_t, wp_t], axis=0)            # (3Cp, Cp)
    if use_bf16:
        w_big = w_big.astype(jnp.bfloat16)
    b_big = jnp.concatenate([pad2(params["b_h"], 1, Cp),
                             pad2(params["b_c"], 1, Cp),
                             pad2(params["b_p"], 1, Cp)], axis=0)  # (3, Cp) f32

    # --- reweight MLP weights (kept f32); W_r2 permuted to branch-major ------
    wr1_t = pad2(params["W_r1"].T, Cp, Crp)                        # (Cp, Crp)
    b_r1p = pad2(params["b_r1"], 1, Crp)                           # (1, Crp)

    # original reweight.3 output index c*3 + k  ->  branch-major k*Cp + c
    w_r2_ck = params["W_r2"].reshape(C, 3, Cr)                     # [c, k, :]
    w_r2_b = jnp.transpose(w_r2_ck, (1, 0, 2))                     # (3, C, Cr)
    w_r2_b = jnp.pad(w_r2_b, ((0, 0), (0, Cp - C), (0, Crp - Cr))) # (3, Cp, Crp)
    wr2p_t = jnp.transpose(w_r2_b.reshape(3 * Cp, Crp))            # (Crp, 3Cp)
    b_r2_b = jnp.transpose(params["b_r2"].reshape(C, 3))           # (3, C)
    b_r2p = jnp.pad(b_r2_b, ((0, 0), (0, Cp - C))).reshape(1, 3 * Cp)

    kernel = functools.partial(_cycle_block_kernel, H=H, W=W, Cp=Cp,
                               distinct_shifts=distinct_shifts)

    full = lambda arr: pl.BlockSpec(arr.shape, lambda b: (0,) * arr.ndim)

    grid_spec = pltpu.PrefetchScalarGridSpec(
        num_scalar_prefetch=0,
        grid=(B,),
        in_specs=[
            pl.BlockSpec((1, H * W, Cp), lambda b: (b, 0, 0)),   # x (flattened)
            full(chan_shift),
            full(w_big), full(b_big),
            full(wr1_t), full(b_r1p),
            full(wr2p_t), full(b_r2p),
        ],
        out_specs=pl.BlockSpec((1, H * W, Cp), lambda b: (b, 0, 0)),
    )

    out = pl.pallas_call(
        kernel,
        out_shape=jax.ShapeDtypeStruct((B, H * W, Cp), jnp.float32),
        grid_spec=grid_spec,
        compiler_params=pltpu.CompilerParams(
            dimension_semantics=("parallel",),
            vmem_limit_bytes=48 * 1024 * 1024),
    )(xr, chan_shift, w_big, b_big, wr1_t, b_r1p, wr2p_t, b_r2p)

    return out[:, :, :C].reshape(B, H, W, C)


# ---------------------------------------------------------------------------
# Pure-JAX reference (mirrors the PyTorch module exactly) for verification.
# ---------------------------------------------------------------------------
def cycle_shift_nhwc(x, shifts):
    """Per-channel zero-filled shift of x (B,H,W,C) along the H axis."""
    B, H, W, C = x.shape
    cols = []
    for c, s in enumerate(shifts):
        xc = x[..., c]
        if s == 0:
            cols.append(xc)
        elif s > 0:
            z = jnp.zeros((B, s, W), x.dtype)
            cols.append(jnp.concatenate([z, xc[:, : H - s, :]], axis=1))
        else:
            z = jnp.zeros((B, -s, W), x.dtype)
            cols.append(jnp.concatenate([xc[:, -s:, :], z], axis=1))
    return jnp.stack(cols, axis=-1)


def cycle_block_reference(x, params, shift_size=5):
    B, H, W, C = x.shape
    pad = shift_size // 2
    xs = cycle_shift_nhwc(x, shift_list(pad, C))
    x_h = xs @ params["W_h"].T + params["b_h"][0]
    x_w = x_h                                  # PyTorch code reuses the same path
    x_c = x @ params["W_c"].T + params["b_c"][0]
    a = (x_h + x_w + x_c).mean(axis=(1, 2))    # (B, C)
    h1 = jax.nn.gelu(a @ params["W_r1"].T + params["b_r1"][0], approximate=False)
    z = h1 @ params["W_r2"].T + params["b_r2"][0]            # (B, 3C)
    zz = z.reshape(B, C, 3).transpose(2, 0, 1)               # (3, B, C)
    wgt = jax.nn.softmax(zz, axis=0)[:, :, None, None, :]    # (3, B, 1, 1, C)
    y = x_h * wgt[0] + x_w * wgt[1] + x_c * wgt[2]
    return y @ params["W_p"].T + params["b_p"][0]


# ---------------------------------------------------------------------------
def make_params(key, hidden_dim):
    ks = jax.random.split(key, 10)
    C = hidden_dim
    n = lambda k, shape, s=0.05: (s * jax.random.normal(k, shape)).astype(jnp.float32)
    return {
        "W_h": n(ks[0], (C, C)),           "b_h": n(ks[1], (1, C)),
        "W_c": n(ks[2], (C, C)),           "b_c": n(ks[3], (1, C)),
        "W_r1": n(ks[4], (C // 4, C)),     "b_r1": n(ks[5], (1, C // 4)),
        "W_r2": n(ks[6], (3 * C, C // 4)), "b_r2": n(ks[7], (1, 3 * C)),
        "W_p": n(ks[8], (C, C)),           "b_p": n(ks[9], (1, C)),
    }


if __name__ == "__main__":
    B, H, W, C = 2, 8, 8, 16
    key = jax.random.PRNGKey(0)
    kx, kp = jax.random.split(key)
    x = jax.random.normal(kx, (B, H, W, C), dtype=jnp.float32)
    params = make_params(kp, C)

    ref = cycle_block_reference(x, params)

    # f32 path (tight check; small slack for the EUP approx reciprocal + reassoc.)
    out_f32 = jax.block_until_ready(cycle_block_pallas(x, params, use_bf16=False))
    assert out_f32.shape == (B, H, W, C)
    err_f32 = jnp.max(jnp.abs(out_f32 - ref))
    assert jnp.allclose(out_f32, ref, atol=2e-3, rtol=2e-3), (
        f"f32 max abs err = {err_f32}")

    # bf16-input path (halved HBM/VMEM traffic; f32 accumulation) — looser check.
    out_bf16 = jax.block_until_ready(cycle_block_pallas(x, params, use_bf16=True))
    err_bf16 = jnp.max(jnp.abs(out_bf16 - ref))
    assert jnp.allclose(out_bf16, ref, atol=2e-2, rtol=2e-2), (
        f"bf16 max abs err = {err_bf16}")

    print("KERNEL_OK")
</pallas_src>

<mosaic_0001>
module attributes {stable_mosaic.version = 11 : i64} {
  func.func @_cycle_block_kernel(%arg0: i32, %arg1: memref<1x64x128xf32, #tpu.memory_space<vmem>>, %arg2: memref<1x128xi32, #tpu.memory_space<vmem>>, %arg3: memref<384x128xf32, #tpu.memory_space<vmem>>, %arg4: memref<3x128xf32, #tpu.memory_space<vmem>>, %arg5: memref<128x128xf32, #tpu.memory_space<vmem>>, %arg6: memref<1x128xf32, #tpu.memory_space<vmem>>, %arg7: memref<128x384xf32, #tpu.memory_space<vmem>>, %arg8: memref<1x384xf32, #tpu.memory_space<vmem>>, %arg9: memref<1x64x128xf32, #tpu.memory_space<vmem>>) attributes {dimension_semantics = [#tpu.dimension_semantics<parallel>], iteration_bounds = array<i64: 2>, scalar_prefetch = 0 : i64, scratch_operands = 0 : i64, tpu.core_type = #tpu.core_type<tc>, window_params = [{transform_indices = @transform_0, window_bounds = array<i64: 1, 64, 128>}, {pipeline_mode = #tpu.pipeline_mode<synchronous>, transform_indices = @transform_1, window_bounds = array<i64: 1, 128>}, {pipeline_mode = #tpu.pipeline_mode<synchronous>, transform_indices = @transform_2, window_bounds = array<i64: 384, 128>}, {pipeline_mode = #tpu.pipeline_mode<synchronous>, transform_indices = @transform_3, window_bounds = array<i64: 3, 128>}, {pipeline_mode = #tpu.pipeline_mode<synchronous>, transform_indices = @transform_4, window_bounds = array<i64: 128, 128>}, {pipeline_mode = #tpu.pipeline_mode<synchronous>, transform_indices = @transform_5, window_bounds = array<i64: 1, 128>}, {pipeline_mode = #tpu.pipeline_mode<synchronous>, transform_indices = @transform_6, window_bounds = array<i64: 128, 384>}, {pipeline_mode = #tpu.pipeline_mode<synchronous>, transform_indices = @transform_7, window_bounds = array<i64: 1, 384>}, {transform_indices = @transform_8, window_bounds = array<i64: 1, 64, 128>}]} {
    %c0 = arith.constant 0 : index
    %c0_0 = arith.constant 0 : index
    %c0_1 = arith.constant 0 : index
    %0 = vector.load %arg1[%c0, %c0_0, %c0_1] : memref<1x64x128xf32, #tpu.memory_space<vmem>>, vector<1x64x128xf32>
    %1 = vector.shape_cast %0 : vector<1x64x128xf32> to vector<64x128xf32>
    %c0_2 = arith.constant 0 : index
    %c0_3 = arith.constant 0 : index
    %2 = vector.load %arg2[%c0_2, %c0_3] : memref<1x128xi32, #tpu.memory_space<vmem>>, vector<1x128xi32>
    %3 = tpu.iota {dimensions = array<i32: 0>} : vector<64x1xi32>
    %cst = arith.constant 0.000000e+00 : f32
    %4 = vector.broadcast %cst : f32 to vector<64x128xf32>
    %5 = vector.extract_strided_slice %1 {offsets = [16, 0], sizes = [48, 128], strides = [1, 1]} : vector<64x128xf32> to vector<48x128xf32>
    %6 = vector.extract_strided_slice %1 {offsets = [0, 0], sizes = [16, 128], strides = [1, 1]} : vector<64x128xf32> to vector<16x128xf32>
    %7 = tpu.concatenate %5, %6 in 0 : vector<48x128xf32>, vector<16x128xf32> -> vector<64x128xf32>
    %c-16_i32 = arith.constant -16 : i32
    %8 = vector.broadcast %c-16_i32 : i32 to vector<64x1xi32>
    %9 = arith.cmpi sge, %3, %8 : vector<64x1xi32>
    %c48_i32 = arith.constant 48 : i32
    %10 = vector.broadcast %c48_i32 : i32 to vector<64x1xi32>
    %11 = arith.cmpi slt, %3, %10 : vector<64x1xi32>
    %12 = arith.andi %9, %11 : vector<64x1xi1>
    %13 = arith.extui %12 : vector<64x1xi1> to vector<64x1xi32>
    %14 = arith.sitofp %13 : vector<64x1xi32> to vector<64x1xf32>
    %c-2_i32 = arith.constant -2 : i32
    %15 = vector.broadcast %c-2_i32 : i32 to vector<1x128xi32>
    %16 = arith.cmpi eq, %2, %15 : vector<1x128xi32>
    %17 = arith.extui %16 : vector<1x128xi1> to vector<1x128xi32>
    %18 = arith.sitofp %17 : vector<1x128xi32> to vector<1x128xf32>
    %19 = vector.broadcast %14 : vector<64x1xf32> to vector<64x128xf32>
    %20 = arith.mulf %7, %19 : vector<64x128xf32>
    %21 = vector.broadcast %18 : vector<1x128xf32> to vector<64x128xf32>
    %22 = arith.mulf %20, %21 : vector<64x128xf32>
    %23 = arith.addf %4, %22 : vector<64x128xf32>
    %24 = vector.extract_strided_slice %1 {offsets = [8, 0], sizes = [56, 128], strides = [1, 1]} : vector<64x128xf32> to vector<56x128xf32>
    %25 = vector.extract_strided_slice %1 {offsets = [0, 0], sizes = [8, 128], strides = [1, 1]} : vector<64x128xf32> to vector<8x128xf32>
    %26 = tpu.concatenate %24, %25 in 0 : vector<56x128xf32>, vector<8x128xf32> -> vector<64x128xf32>
    %c-8_i32 = arith.constant -8 : i32
    %27 = vector.broadcast %c-8_i32 : i32 to vector<64x1xi32>
    %28 = arith.cmpi sge, %3, %27 : vector<64x1xi32>
    %c56_i32 = arith.constant 56 : i32
    %29 = vector.broadcast %c56_i32 : i32 to vector<64x1xi32>
    %30 = arith.cmpi slt, %3, %29 : vector<64x1xi32>
    %31 = arith.andi %28, %30 : vector<64x1xi1>
    %32 = arith.extui %31 : vector<64x1xi1> to vector<64x1xi32>
    %33 = arith.sitofp %32 : vector<64x1xi32> to vector<64x1xf32>
    %c-1_i32 = arith.constant -1 : i32
    %34 = vector.broadcast %c-1_i32 : i32 to vector<1x128xi32>
    %35 = arith.cmpi eq, %2, %34 : vector<1x128xi32>
    %36 = arith.extui %35 : vector<1x128xi1> to vector<1x128xi32>
    %37 = arith.sitofp %36 : vector<1x128xi32> to vector<1x128xf32>
    %38 = vector.broadcast %33 : vector<64x1xf32> to vector<64x128xf32>
    %39 = arith.mulf %26, %38 : vector<64x128xf32>
    %40 = vector.broadcast %37 : vector<1x128xf32> to vector<64x128xf32>
    %41 = arith.mulf %39, %40 : vector<64x128xf32>
    %42 = arith.addf %23, %41 : vector<64x128xf32>
    %c0_i32 = arith.constant 0 : i32
    %43 = vector.broadcast %c0_i32 : i32 to vector<64x1xi32>
    %44 = arith.cmpi sge, %3, %43 : vector<64x1xi32>
    %c64_i32 = arith.constant 64 : i32
    %45 = vector.broadcast %c64_i32 : i32 to vector<64x1xi32>
    %46 = arith.cmpi slt, %3, %45 : vector<64x1xi32>
    %47 = arith.andi %44, %46 : vector<64x1xi1>
    %48 = arith.extui %47 : vector<64x1xi1> to vector<64x1xi32>
    %49 = arith.sitofp %48 : vector<64x1xi32> to vector<64x1xf32>
    %c0_i32_4 = arith.constant 0 : i32
    %50 = vector.broadcast %c0_i32_4 : i32 to vector<1x128xi32>
    %51 = arith.cmpi eq, %2, %50 : vector<1x128xi32>
    %52 = arith.extui %51 : vector<1x128xi1> to vector<1x128xi32>
    %53 = arith.sitofp %52 : vector<1x128xi32> to vector<1x128xf32>
    %54 = vector.broadcast %49 : vector<64x1xf32> to vector<64x128xf32>
    %55 = arith.mulf %1, %54 : vector<64x128xf32>
    %56 = vector.broadcast %53 : vector<1x128xf32> to vector<64x128xf32>
    %57 = arith.mulf %55, %56 : vector<64x128xf32>
    %58 = arith.addf %42, %57 : vector<64x128xf32>
    %59 = vector.extract_strided_slice %1 {offsets = [56, 0], sizes = [8, 128], strides = [1, 1]} : vector<64x128xf32> to vector<8x128xf32>
    %60 = vector.extract_strided_slice %1 {offsets = [0, 0], sizes = [56, 128], strides = [1, 1]} : vector<64x128xf32> to vector<56x128xf32>
    %61 = tpu.concatenate %59, %60 in 0 : vector<8x128xf32>, vector<56x128xf32> -> vector<64x128xf32>
    %c8_i32 = arith.constant 8 : i32
    %62 = vector.broadcast %c8_i32 : i32 to vector<64x1xi32>
    %63 = arith.cmpi sge, %3, %62 : vector<64x1xi32>
    %c72_i32 = arith.constant 72 : i32
    %64 = vector.broadcast %c72_i32 : i32 to vector<64x1xi32>
    %65 = arith.cmpi slt, %3, %64 : vector<64x1xi32>
    %66 = arith.andi %63, %65 : vector<64x1xi1>
    %67 = arith.extui %66 : vector<64x1xi1> to vector<64x1xi32>
    %68 = arith.sitofp %67 : vector<64x1xi32> to vector<64x1xf32>
    %c1_i32 = arith.constant 1 : i32
    %69 = vector.broadcast %c1_i32 : i32 to vector<1x128xi32>
    %70 = arith.cmpi eq, %2, %69 : vector<1x128xi32>
    %71 = arith.extui %70 : vector<1x128xi1> to vector<1x128xi32>
    %72 = arith.sitofp %71 : vector<1x128xi32> to vector<1x128xf32>
    %73 = vector.broadcast %68 : vector<64x1xf32> to vector<64x128xf32>
    %74 = arith.mulf %61, %73 : vector<64x128xf32>
    %75 = vector.broadcast %72 : vector<1x128xf32> to vector<64x128xf32>
    %76 = arith.mulf %74, %75 : vector<64x128xf32>
    %77 = arith.addf %58, %76 : vector<64x128xf32>
    %78 = vector.extract_strided_slice %1 {offsets = [48, 0], sizes = [16, 128], strides = [1, 1]} : vector<64x128xf32> to vector<16x128xf32>
    %79 = vector.extract_strided_slice %1 {offsets = [0, 0], sizes = [48, 128], strides = [1, 1]} : vector<64x128xf32> to vector<48x128xf32>
    %80 = tpu.concatenate %78, %79 in 0 : vector<16x128xf32>, vector<48x128xf32> -> vector<64x128xf32>
    %c16_i32 = arith.constant 16 : i32
    %81 = vector.broadcast %c16_i32 : i32 to vector<64x1xi32>
    %82 = arith.cmpi sge, %3, %81 : vector<64x1xi32>
    %c80_i32 = arith.constant 80 : i32
    %83 = vector.broadcast %c80_i32 : i32 to vector<64x1xi32>
    %84 = arith.cmpi slt, %3, %83 : vector<64x1xi32>
    %85 = arith.andi %82, %84 : vector<64x1xi1>
    %86 = arith.extui %85 : vector<64x1xi1> to vector<64x1xi32>
    %87 = arith.sitofp %86 : vector<64x1xi32> to vector<64x1xf32>
    %c2_i32 = arith.constant 2 : i32
    %88 = vector.broadcast %c2_i32 : i32 to vector<1x128xi32>
    %89 = arith.cmpi eq, %2, %88 : vector<1x128xi32>
    %90 = arith.extui %89 : vector<1x128xi1> to vector<1x128xi32>
    %91 = arith.sitofp %90 : vector<1x128xi32> to vector<1x128xf32>
    %92 = vector.broadcast %87 : vector<64x1xf32> to vector<64x128xf32>
    %93 = arith.mulf %80, %92 : vector<64x128xf32>
    %94 = vector.broadcast %91 : vector<1x128xf32> to vector<64x128xf32>
    %95 = arith.mulf %93, %94 : vector<64x128xf32>
    %96 = arith.addf %77, %95 : vector<64x128xf32>
    %97 = tpu.concatenate %96, %1 in 1 : vector<64x128xf32>, vector<64x128xf32> -> vector<64x256xf32>
    %c0_5 = arith.constant 0 : index
    %c0_6 = arith.constant 0 : index
    %98 = vector.load %arg3[%c0_5, %c0_6] : memref<384x128xf32, #tpu.memory_space<vmem>>, vector<128x128xf32>
    %c128 = arith.constant 128 : index
    %c0_7 = arith.constant 0 : index
    %99 = vector.load %arg3[%c128, %c0_7] : memref<384x128xf32, #tpu.memory_space<vmem>>, vector<128x128xf32>
    %c0_8 = arith.constant 0 : index
    %c0_9 = arith.constant 0 : index
    %100 = vector.load %arg4[%c0_8, %c0_9] : memref<3x128xf32, #tpu.memory_space<vmem>>, vector<1x128xf32>
    %c1 = arith.constant 1 : index
    %c0_10 = arith.constant 0 : index
    %101 = vector.load %arg4[%c1, %c0_10] : memref<3x128xf32, #tpu.memory_space<vmem>>, vector<1x128xf32>
    %c2 = arith.constant 2 : index
    %c0_11 = arith.constant 0 : index
    %102 = vector.load %arg4[%c2, %c0_11] : memref<3x128xf32, #tpu.memory_space<vmem>>, vector<1x128xf32>
    %cst_12 = arith.constant 1.562500e-02 : f32
    %103 = vector.broadcast %cst_12 : f32 to vector<1x64xf32>
    %cst_13 = arith.constant dense<0.000000e+00> : vector<1x256xf32>
    %104 = tpu.matmul %103, %97, %cst_13 {dimension_numbers = #tpu.dot_dimension_numbers<[1], [0], [0], [1], [0, 0, 1, 1], [], []>} : vector<1x64xf32>, vector<64x256xf32>, vector<1x256xf32> -> vector<1x256xf32>
    %105 = vector.extract_strided_slice %104 {offsets = [0, 0], sizes = [1, 128], strides = [1, 1]} : vector<1x256xf32> to vector<1x128xf32>
    %cst_14 = arith.constant dense<0.000000e+00> : vector<1x128xf32>
    %106 = tpu.matmul %105, %98, %cst_14 {dimension_numbers = #tpu.dot_dimension_numbers<[1], [0], [0], [1], [0, 0, 1, 1], [], []>} : vector<1x128xf32>, vector<128x128xf32>, vector<1x128xf32> -> vector<1x128xf32>
    %107 = arith.addf %106, %100 : vector<1x128xf32>
    %108 = vector.extract_strided_slice %104 {offsets = [0, 128], sizes = [1, 128], strides = [1, 1]} : vector<1x256xf32> to vector<1x128xf32>
    %cst_15 = arith.constant dense<0.000000e+00> : vector<1x128xf32>
    %109 = tpu.matmul %108, %99, %cst_15 {dimension_numbers = #tpu.dot_dimension_numbers<[1], [0], [0], [1], [0, 0, 1, 1], [], []>} : vector<1x128xf32>, vector<128x128xf32>, vector<1x128xf32> -> vector<1x128xf32>
    %110 = arith.addf %109, %101 : vector<1x128xf32>
    %cst_16 = arith.constant 2.000000e+00 : f32
    %111 = vector.broadcast %cst_16 : f32 to vector<1x128xf32>
    %112 = arith.mulf %111, %107 : vector<1x128xf32>
    %113 = arith.addf %112, %110 : vector<1x128xf32>
    %c0_17 = arith.constant 0 : index
    %c0_18 = arith.constant 0 : index
    %114 = vector.load %arg5[%c0_17, %c0_18] : memref<128x128xf32, #tpu.memory_space<vmem>>, vector<128x128xf32>
    %cst_19 = arith.constant dense<0.000000e+00> : vector<1x128xf32>
    %115 = tpu.matmul %113, %114, %cst_19 {dimension_numbers = #tpu.dot_dimension_numbers<[1], [0], [0], [1], [0, 0, 1, 1], [], []>} : vector<1x128xf32>, vector<128x128xf32>, vector<1x128xf32> -> vector<1x128xf32>
    %c0_20 = arith.constant 0 : index
    %c0_21 = arith.constant 0 : index
    %116 = vector.load %arg6[%c0_20, %c0_21] : memref<1x128xf32, #tpu.memory_space<vmem>>, vector<1x128xf32>
    %117 = arith.addf %115, %116 : vector<1x128xf32>
    %cst_22 = arith.constant 5.000000e-01 : f32
    %118 = vector.broadcast %cst_22 : f32 to vector<1x128xf32>
    %119 = arith.mulf %118, %117 : vector<1x128xf32>
    %cst_23 = arith.constant 0.707106769 : f32
    %120 = vector.broadcast %cst_23 : f32 to vector<1x128xf32>
    %121 = arith.mulf %117, %120 : vector<1x128xf32>
    %122 = math.erf %121 : vector<1x128xf32>
    %cst_24 = arith.constant 1.000000e+00 : f32
    %123 = vector.broadcast %cst_24 : f32 to vector<1x128xf32>
    %124 = arith.addf %123, %122 : vector<1x128xf32>
    %125 = arith.mulf %119, %124 : vector<1x128xf32>
    %c0_25 = arith.constant 0 : index
    %c0_26 = arith.constant 0 : index
    %126 = vector.load %arg7[%c0_25, %c0_26] : memref<128x384xf32, #tpu.memory_space<vmem>>, vector<128x384xf32>
    %cst_27 = arith.constant dense<0.000000e+00> : vector<1x384xf32>
    %127 = tpu.matmul %125, %126, %cst_27 {dimension_numbers = #tpu.dot_dimension_numbers<[1], [0], [0], [1], [0, 0, 1, 1], [], []>} : vector<1x128xf32>, vector<128x384xf32>, vector<1x384xf32> -> vector<1x384xf32>
    %c0_28 = arith.constant 0 : index
    %c0_29 = arith.constant 0 : index
    %128 = vector.load %arg8[%c0_28, %c0_29] : memref<1x384xf32, #tpu.memory_space<vmem>>, vector<1x384xf32>
    %129 = arith.addf %127, %128 : vector<1x384xf32>
    %130 = vector.extract_strided_slice %129 {offsets = [0, 0], sizes = [1, 128], strides = [1, 1]} : vector<1x384xf32> to vector<1x128xf32>
    %131 = vector.extract_strided_slice %129 {offsets = [0, 128], sizes = [1, 128], strides = [1, 1]} : vector<1x384xf32> to vector<1x128xf32>
    %132 = vector.extract_strided_slice %129 {offsets = [0, 256], sizes = [1, 128], strides = [1, 1]} : vector<1x384xf32> to vector<1x128xf32>
    %133 = arith.maximumf %130, %131 : vector<1x128xf32>
    %134 = arith.maximumf %133, %132 : vector<1x128xf32>
    %135 = arith.subf %130, %134 : vector<1x128xf32>
    %136 = math.exp %135 : vector<1x128xf32>
    %137 = arith.subf %131, %134 : vector<1x128xf32>
    %138 = math.exp %137 : vector<1x128xf32>
    %139 = arith.subf %132, %134 : vector<1x128xf32>
    %140 = math.exp %139 : vector<1x128xf32>
    %141 = arith.addf %136, %138 : vector<1x128xf32>
    %142 = arith.addf %141, %140 : vector<1x128xf32>
    %143 = tpu.reciprocal %142 {approx = true} : vector<1x128xf32> -> vector<1x128xf32>
    %144 = arith.addf %136, %138 : vector<1x128xf32>
    %145 = arith.mulf %144, %143 : vector<1x128xf32>
    %146 = arith.mulf %140, %143 : vector<1x128xf32>
    %147 = vector.broadcast %145 : vector<1x128xf32> to vector<128x128xf32>
    %148 = arith.mulf %98, %147 : vector<128x128xf32>
    %149 = vector.broadcast %146 : vector<1x128xf32> to vector<128x128xf32>
    %150 = arith.mulf %99, %149 : vector<128x128xf32>
    %151 = tpu.concatenate %148, %150 in 0 : vector<128x128xf32>, vector<128x128xf32> -> vector<256x128xf32>
    %152 = arith.mulf %100, %145 : vector<1x128xf32>
    %153 = arith.mulf %101, %146 : vector<1x128xf32>
    %154 = arith.addf %152, %153 : vector<1x128xf32>
    %cst_30 = arith.constant dense<0.000000e+00> : vector<64x128xf32>
    %155 = tpu.matmul %97, %151, %cst_30 {dimension_numbers = #tpu.dot_dimension_numbers<[1], [0], [0], [1], [0, 0, 1, 1], [], []>} : vector<64x256xf32>, vector<256x128xf32>, vector<64x128xf32> -> vector<64x128xf32>
    %156 = vector.broadcast %154 : vector<1x128xf32> to vector<64x128xf32>
    %157 = arith.addf %155, %156 : vector<64x128xf32>
    %c256 = arith.constant 256 : index
    %c0_31 = arith.constant 0 : index
    %158 = vector.load %arg3[%c256, %c0_31] : memref<384x128xf32, #tpu.memory_space<vmem>>, vector<128x128xf32>
    %cst_32 = arith.constant dense<0.000000e+00> : vector<64x128xf32>
    %159 = tpu.matmul %157, %158, %cst_32 {dimension_numbers = #tpu.dot_dimension_numbers<[1], [0], [0], [1], [0, 0, 1, 1], [], []>} : vector<64x128xf32>, vector<128x128xf32>, vector<64x128xf32> -> vector<64x128xf32>
    %160 = vector.broadcast %102 : vector<1x128xf32> to vector<64x128xf32>
    %161 = arith.addf %159, %160 : vector<64x128xf32>
    %162 = vector.shape_cast %161 : vector<64x128xf32> to vector<1x64x128xf32>
    %c0_33 = arith.constant 0 : index
    %c0_34 = arith.constant 0 : index
    %c0_35 = arith.constant 0 : index
    %163 = vector.load %arg9[%c0_33, %c0_34, %c0_35] : memref<1x64x128xf32, #tpu.memory_space<vmem>>, vector<1x64x128xf32>
    tpu.vector_store %arg9[%c0_33, %c0_34, %c0_35], %162 {strides = array<i32>} : memref<1x64x128xf32, #tpu.memory_space<vmem>>, vector<1x64x128xf32>,
    return
  }
  func.func @transform_0(%arg0: i32) -> (i32, i32, i32) {
    %c0_i32 = arith.constant 0 : i32
    %c0_i32_0 = arith.constant 0 : i32
    %c0_i32_1 = arith.constant 0 : i32
    return %arg0, %c0_i32, %c0_i32_0 : i32, i32, i32
  }
  func.func @transform_1(%arg0: i32) -> (i32, i32) {
    %c0_i32 = arith.constant 0 : i32
    %c0_i32_0 = arith.constant 0 : i32
    %c0_i32_1 = arith.constant 0 : i32
    return %c0_i32, %c0_i32_0 : i32, i32
  }
  func.func @transform_2(%arg0: i32) -> (i32, i32) {
    %c0_i32 = arith.constant 0 : i32
    %c0_i32_0 = arith.constant 0 : i32
    %c0_i32_1 = arith.constant 0 : i32
    return %c0_i32, %c0_i32_0 : i32, i32
  }
  func.func @transform_3(%arg0: i32) -> (i32, i32) {
    %c0_i32 = arith.constant 0 : i32
    %c0_i32_0 = arith.constant 0 : i32
    %c0_i32_1 = arith.constant 0 : i32
    return %c0_i32, %c0_i32_0 : i32, i32
  }
  func.func @transform_4(%arg0: i32) -> (i32, i32) {
    %c0_i32 = arith.constant 0 : i32
    %c0_i32_0 = arith.constant 0 : i32
    %c0_i32_1 = arith.constant 0 : i32
    return %c0_i32, %c0_i32_0 : i32, i32
  }
  func.func @transform_5(%arg0: i32) -> (i32, i32) {
    %c0_i32 = arith.constant 0 : i32
    %c0_i32_0 = arith.constant 0 : i32
    %c0_i32_1 = arith.constant 0 : i32
    return %c0_i32, %c0_i32_0 : i32, i32
  }
  func.func @transform_6(%arg0: i32) -> (i32, i32) {
    %c0_i32 = arith.constant 0 : i32
    %c0_i32_0 = arith.constant 0 : i32
    %c0_i32_1 = arith.constant 0 : i32
    return %c0_i32, %c0_i32_0 : i32, i32
  }
  func.func @transform_7(%arg0: i32) -> (i32, i32) {
    %c0_i32 = arith.constant 0 : i32
    %c0_i32_0 = arith.constant 0 : i32
    %c0_i32_1 = arith.constant 0 : i32
    return %c0_i32, %c0_i32_0 : i32, i32
  }
  func.func @transform_8(%arg0: i32) -> (i32, i32, i32) {
    %c0_i32 = arith.constant 0 : i32
    %c0_i32_0 = arith.constant 0 : i32
    %c0_i32_1 = arith.constant 0 : i32
    return %arg0, %c0_i32, %c0_i32_0 : i32, i32, i32
  }
}

</mosaic_0001>

<llo_original>
// kernel: tpu_custom_call.1
$region0: #{tpu_custom_call.1}
  #allocation0 [shape = 'u32[]', space=smem, size = 0x4, offset = 0x4, fixed_abs, tag = 'smem constant byte address 0x4 - core index']
  #allocation1 [shape = 'u32[144,128]{1,0:T(1,128)}', space=vmem, size = 0x12000, scoped, tag = 'internal scratch']
  %s0 = inlined_call_operand.hbm [shape: f32[2,64,128], index: 0, kind: input, shape index: {}]
  %s1 = inlined_call_operand.hbm [shape: s32[1,128], index: 1, kind: input, shape index: {}]
  %s2 = inlined_call_operand.hbm [shape: f32[384,128], index: 2, kind: input, shape index: {}]
  %s3 = inlined_call_operand.vmem [shape: f32[3,128], index: 3, kind: input, shape index: {}]
  %s4 = inlined_call_operand.hbm [shape: f32[128,128], index: 4, kind: input, shape index: {}]
  %s5 = inlined_call_operand.vmem [shape: f32[1,128], index: 5, kind: input, shape index: {}]
  %s6 = inlined_call_operand.hbm [shape: f32[128,384], index: 6, kind: input, shape index: {}]
  %s7 = inlined_call_operand.vmem [shape: f32[1,384], index: 7, kind: input, shape index: {}]
  %s8 = inlined_call_operand.hbm [shape: f32[2,64,128], index: 8, kind: output, shape index: {}]
  %s9 = sld [smem:[#allocation0]]
  $region85: #{tpu_custom_call.1} parent=0
    _
  %s11 = ssub.s32 1, %s9
  %s12 = scalar_select 0, %s11, %s9
  $region1: #{tpu_custom_call.1} parent=0
    #allocation2 [shape = 'u8[65536]{0}', space=vmem, size = 0x10000, scoped, tag = 'input window, operand 0']
    #allocation3 [shape = 's32[2]{0}', space=sflag, size = 0x8, scoped, tag = 'scoped memory for tpu_custom_call.1']
    #allocation4 [shape = 's32[2]{0}', space=sflag, size = 0x8, scoped, tag = 'scoped memory for tpu_custom_call.1']
    #allocation5 [shape = 'u8[512]{0}', space=vmem, size = 0x400, scoped, tag = 'input window, operand 1, single buffered']
    #allocation6 [shape = 's32[1]{0}', space=sflag, size = 0x4, scoped, tag = 'scoped memory for tpu_custom_call.1']
    #allocation7 [shape = 'u8[196608]{0}', space=vmem, size = 0x30000, scoped, tag = 'input window, operand 2, single buffered']
    #allocation8 [shape = 'u8[65536]{0}', space=vmem, size = 0x10000, scoped, tag = 'input window, operand 4, single buffered']
    #allocation9 [shape = 's32[1]{0}', space=sflag, size = 0x4, scoped, tag = 'scoped memory for tpu_custom_call.1']
    #allocation10 [shape = 'u8[196608]{0}', space=vmem, size = 0x30000, scoped, tag = 'input window, operand 6, single buffered']
    #allocation11 [shape = 'u8[65536]{0}', space=vmem, size = 0x10000, scoped, tag = 'output window, operand 0']
    %13 = vsyncpa [#allocation3], 0
    %s14 = scalar_lea.sflag [#allocation3], 1
    %15 = vsyncpa %s14, 0
    %16 = vsyncpa [#allocation6], 0
    %17 = vsyncpa [#allocation9], 0
    %18 = vsyncpa [#allocation4], 0
    %s19 = scalar_lea.sflag [#allocation4], 1
    %20 = vsyncpa %s19, 0
    loop: start=0, step=1, limit=4
    $region2: #{tpu_custom_call.1} parent=1 // loop_pre_header
      _
    $region3: #{tpu_custom_call.1} parent=1 // loop_header
      %s22 = sphi 0, %s26
      %p23 = scmp.ge.s32.totalorder %s22, 4
      %s32 = sphi 0, %s34
      %s35 = sphi 0, %s32
      %s36 = sphi 0, %s35
      %s52 = sphi 0, %s36
      %s56 = sphi 0, %s56
      %s58 = sphi 0, %s56
      %s59 = sphi 0, %s58
      %s73 = sphi 0, %s59
      %s77 = sphi 0, %s77
      %s79 = sphi 0, %s77
      %s80 = sphi 0, %s79
      %s94 = sphi 0, %s80
      %s98 = sphi 0, %s98
      %s100 = sphi 0, %s98
      %s101 = sphi 0, %s100
      %s115 = sphi 0, %s101
      %s119 = sphi 0, %s119
      %s121 = sphi 0, %s119
      %s122 = sphi 0, %s121
      %s136 = sphi 0, %s122
      %s140 = sphi 0, %s140
      %s142 = sphi 0, %s140
      %s143 = sphi 0, %s142
      %s157 = sphi 0, %s143
      %s161 = sphi 0, %s161
      %s163 = sphi 0, %s161
      %s164 = sphi 0, %s163
      %s178 = sphi 0, %s164
      %s182 = sphi 0, %s182
      %s184 = sphi 0, %s182
      %s185 = sphi 0, %s184
      %s199 = sphi 0, %s185
      %s205 = sphi 0, %s207
      %s208 = sphi 0, %s205
      %s209 = sphi 0, %s208
      %s225 = sphi 0, %s209
    $region4: #{tpu_custom_call.1} parent=1 // loop_header_branch
      %25 = sbr.rel (%p23) target = $region8
    $region5: #{tpu_custom_call.1} parent=1 // loop_body
      %s27 = ssub.s32 %s22, 1
      %s28 = ssub.s32 %s22, 2
      %s29 = sadd.s32 %s22, 1
      %s30 = ssub.s32 %s22, %s29
      %p31 = scmp.eq.s32.totalorder %s30, 0
      %s33 = sadd.s32 %s32, 1
      %s34 = scalar_select %p31, %s32, %s33
      %p37 = pneg %p31
      %p38 = scmp.eq.s32.totalorder %s22, 1
      %p39 = por %p37, %p38
      %p40 = scmp.ne.s32.totalorder %s32, %s35
      %p41 = scmp.eq.s32.totalorder %s22, 0
      %p42 = por %p40, %p41
      %p43 = scmp.ne.s32.totalorder %s32, %s35
      %p44 = scmp.eq.s32.totalorder %s27, 1
      %p45 = por %p43, %p44
      %p46 = scmp.ne.s32.totalorder %s35, %s36
      %p47 = scmp.eq.s32.totalorder %s27, 0
      %p48 = por %p46, %p47
      %p49 = scmp.ne.s32.totalorder %s35, %s36
      %p50 = scmp.eq.s32.totalorder %s28, 1
      %p51 = por %p49, %p50
      %p53 = scmp.ne.s32.totalorder %s36, %s52
      %p54 = scmp.eq.s32.totalorder %s28, 0
      %p55 = por %p53, %p54
      %s57 = sadd.s32 %s56, 1
      %p60 = scmp.eq.s32.totalorder %s22, 1
      %p61 = scmp.ne.s32.totalorder %s56, %s58
      %p62 = scmp.eq.s32.totalorder %s22, 0
      %p63 = por %p61, %p62
      %p64 = scmp.ne.s32.totalorder %s56, %s58
      %p65 = scmp.eq.s32.totalorder %s27, 1
      %p66 = por %p64, %p65
      %p67 = scmp.ne.s32.totalorder %s58, %s59
      %p68 = scmp.eq.s32.totalorder %s27, 0
      %p69 = por %p67, %p68
      %p70 = scmp.ne.s32.totalorder %s58, %s59
      %p71 = scmp.eq.s32.totalorder %s28, 1
      %p72 = por %p70, %p71
      %p74 = scmp.ne.s32.totalorder %s59, %s73
      %p75 = scmp.eq.s32.totalorder %s28, 0
      %p76 = por %p74, %p75
      %s78 = sadd.s32 %s77, 1
      %p81 = scmp.eq.s32.totalorder %s22, 1
      %p82 = scmp.ne.s32.totalorder %s77, %s79
      %p83 = scmp.eq.s32.totalorder %s22, 0
      %p84 = por %p82, %p83
      %p85 = scmp.ne.s32.totalorder %s77, %s79
      %p86 = scmp.eq.s32.totalorder %s27, 1
      %p87 = por %p85, %p86
      %p88 = scmp.ne.s32.totalorder %s79, %s80
      %p89 = scmp.eq.s32.totalorder %s27, 0
      %p90 = por %p88, %p89
      %p91 = scmp.ne.s32.totalorder %s79, %s80
      %p92 = scmp.eq.s32.totalorder %s28, 1
      %p93 = por %p91, %p92
      %p95 = scmp.ne.s32.totalorder %s80, %s94
      %p96 = scmp.eq.s32.totalorder %s28, 0
      %p97 = por %p95, %p96
      %s99 = sadd.s32 %s98, 1
      %p102 = scmp.eq.s32.totalorder %s22, 1
      %p103 = scmp.ne.s32.totalorder %s98, %s100
      %p104 = scmp.eq.s32.totalorder %s22, 0
      %p105 = por %p103, %p104
      %p106 = scmp.ne.s32.totalorder %s98, %s100
      %p107 = scmp.eq.s32.totalorder %s27, 1
      %p108 = por %p106, %p107
      %p109 = scmp.ne.s32.totalorder %s100, %s101
      %p110 = scmp.eq.s32.totalorder %s27, 0
      %p111 = por %p109, %p110
      %p112 = scmp.ne.s32.totalorder %s100, %s101
      %p113 = scmp.eq.s32.totalorder %s28, 1
      %p114 = por %p112, %p113
      %p116 = scmp.ne.s32.totalorder %s101, %s115
      %p117 = scmp.eq.s32.totalorder %s28, 0
      %p118 = por %p116, %p117
      %s120 = sadd.s32 %s119, 1
      %p123 = scmp.eq.s32.totalorder %s22, 1
      %p124 = scmp.ne.s32.totalorder %s119, %s121
      %p125 = scmp.eq.s32.totalorder %s22, 0
      %p126 = por %p124, %p125
      %p127 = scmp.ne.s32.totalorder %s119, %s121
      %p128 = scmp.eq.s32.totalorder %s27, 1
      %p129 = por %p127, %p128
      %p130 = scmp.ne.s32.totalorder %s121, %s122
      %p131 = scmp.eq.s32.totalorder %s27, 0
      %p132 = por %p130, %p131
      %p133 = scmp.ne.s32.totalorder %s121, %s122
      %p134 = scmp.eq.s32.totalorder %s28, 1
      %p135 = por %p133, %p134
      %p137 = scmp.ne.s32.totalorder %s122, %s136
      %p138 = scmp.eq.s32.totalorder %s28, 0
      %p139 = por %p137, %p138
      %s141 = sadd.s32 %s140, 1
      %p144 = scmp.eq.s32.totalorder %s22, 1
      %p145 = scmp.ne.s32.totalorder %s140, %s142
      %p146 = scmp.eq.s32.totalorder %s22, 0
      %p147 = por %p145, %p146
      %p148 = scmp.ne.s32.totalorder %s140, %s142
      %p149 = scmp.eq.s32.totalorder %s27, 1
      %p150 = por %p148, %p149
      %p151 = scmp.ne.s32.totalorder %s142, %s143
      %p152 = scmp.eq.s32.totalorder %s27, 0
      %p153 = por %p151, %p152
      %p154 = scmp.ne.s32.totalorder %s142, %s143
      %p155 = scmp.eq.s32.totalorder %s28, 1
      %p156 = por %p154, %p155
      %p158 = scmp.ne.s32.totalorder %s143, %s157
      %p159 = scmp.eq.s32.totalorder %s28, 0
      %p160 = por %p158, %p159
      %s162 = sadd.s32 %s161, 1
      %p165 = scmp.eq.s32.totalorder %s22, 1
      %p166 = scmp.ne.s32.totalorder %s161, %s163
      %p167 = scmp.eq.s32.totalorder %s22, 0
      %p168 = por %p166, %p167
      %p169 = scmp.ne.s32.totalorder %s161, %s163
      %p170 = scmp.eq.s32.totalorder %s27, 1
      %p171 = por %p169, %p170
      %p172 = scmp.ne.s32.totalorder %s163, %s164
      %p173 = scmp.eq.s32.totalorder %s27, 0
      %p174 = por %p172, %p173
      %p175 = scmp.ne.s32.totalorder %s163, %s164
      %p176 = scmp.eq.s32.totalorder %s28, 1
      %p177 = por %p175, %p176
      %p179 = scmp.ne.s32.totalorder %s164, %s178
      %p180 = scmp.eq.s32.totalorder %s28, 0
      %p181 = por %p179, %p180
      %s183 = sadd.s32 %s182, 1
      %p186 = scmp.eq.s32.totalorder %s22, 1
      %p187 = scmp.ne.s32.totalorder %s182, %s184
      %p188 = scmp.eq.s32.totalorder %s22, 0
      %p189 = por %p187, %p188
      %p190 = scmp.ne.s32.totalorder %s182, %s184
      %p191 = scmp.eq.s32.totalorder %s27, 1
      %p192 = por %p190, %p191
      %p193 = scmp.ne.s32.totalorder %s184, %s185
      %p194 = scmp.eq.s32.totalorder %s27, 0
      %p195 = por %p193, %p194
      %p196 = scmp.ne.s32.totalorder %s184, %s185
      %p197 = scmp.eq.s32.totalorder %s28, 1
      %p198 = por %p196, %p197
      %p200 = scmp.ne.s32.totalorder %s185, %s199
      %p201 = scmp.eq.s32.totalorder %s28, 0
      %p202 = por %p200, %p201
      %s203 = ssub.s32 %s22, %s29
      %p204 = scmp.eq.s32.totalorder %s203, 0
      %s206 = sadd.s32 %s205, 1
      %s207 = scalar_select %p204, %s205, %s206
      %p210 = pneg %p204
      %p211 = scmp.eq.s32.totalorder %s22, 1
      %p212 = por %p210, %p211
      %p213 = scmp.ne.s32.totalorder %s205, %s208
      %p214 = scmp.eq.s32.totalorder %s22, 0
      %p215 = por %p213, %p214
      %p216 = scmp.ne.s32.totalorder %s205, %s208
      %p217 = scmp.eq.s32.totalorder %s27, 1
      %p218 = por %p216, %p217
      %p219 = scmp.ne.s32.totalorder %s208, %s209
      %p220 = scmp.eq.s32.totalorder %s27, 0
      %p221 = por %p219, %p220
      %p222 = scmp.ne.s32.totalorder %s208, %s209
      %p223 = scmp.eq.s32.totalorder %s28, 1
      %p224 = por %p222, %p223
      %p226 = scmp.ne.s32.totalorder %s209, %s225
      %p227 = scmp.eq.s32.totalorder %s28, 0
      %p228 = por %p226, %p227
      %p229 = scmp.le.s32.totalorder 1, %s22
      %p230 = scmp.lt.s32.totalorder %s22, 3
      %p231 = pnand %p229, %p230
      %p232 = pneg %p231
      // Predicated region
      $region9: #{tpu_custom_call.1} parent=5 // pred_check
        _
      $region10: #{tpu_custom_call.1} parent=5 // pred_check_branch
        %234 = sbr.rel (%p231) target = $region12
      $region11: #{tpu_custom_call.1} parent=5 // pred_region
        %s235 = ssub.s32 %s22, 1
        // Predicated region
        $region13: #{tpu_custom_call.1} parent=11 // pred_check
          %p236 = pneg %p69
        $region14: #{tpu_custom_call.1} parent=11 // pred_check_branch
          %238 = sbr.rel (%p236) target = $region16
        $region15: #{tpu_custom_call.1} parent=11 // pred_region
          %s240 = ssub.s32 16, 16
          %241 = vsyncadd [#allocation6], %s240
          %s243 = sshll.u32 [#allocation5], 4
          %s244 = int_to_ptr.vmem [resolvable:$true] %s243
          %246 = dma.hbm_to_vmem [thread:$0]  %s1, 16, %s244, [#allocation6]
        $region16: #{tpu_custom_call.1} parent=11 // pred_fallthru
          _
        // Predicated region
        $region17: #{tpu_custom_call.1} parent=11 // pred_check
          %p247 = pneg %p90
        $region18: #{tpu_custom_call.1} parent=11 // pred_check_branch
          %249 = sbr.rel (%p247) target = $region20
        $region19: #{tpu_custom_call.1} parent=11 // pred_region
          %s251 = ssub.s32 6144, 6144
          %252 = vsyncadd [#allocation6], %s251
          %s253 = sshll.u32 [#allocation7], 4
          %s254 = int_to_ptr.vmem [resolvable:$true] %s253
          %259 = dma.hbm_to_vmem [thread:$0]  %s2, 6144, %s254, [#allocation6], 128, 128, 8
        $region20: #{tpu_custom_call.1} parent=11 // pred_fallthru
          _
        // Predicated region
        $region21: #{tpu_custom_call.1} parent=11 // pred_check
          %p260 = pneg %p111
        $region22: #{tpu_custom_call.1} parent=11 // pred_check_branch
          %262 = sbr.rel (%p260) target = $region24
        $region23: #{tpu_custom_call.1} parent=11 // pred_region
          _
        $region24: #{tpu_custom_call.1} parent=11 // pred_fallthru
          _
        // Predicated region
        $region25: #{tpu_custom_call.1} parent=11 // pred_check
          %p263 = pneg %p132
        $region26: #{tpu_custom_call.1} parent=11 // pred_check_branch
          %265 = sbr.rel (%p263) target = $region28
        $region27: #{tpu_custom_call.1} parent=11 // pred_region
          %s267 = ssub.s32 2048, 2048
          %268 = vsyncadd [#allocation9], %s267
          %s269 = sshll.u32 [#allocation8], 4
          %s270 = int_to_ptr.vmem [resolvable:$true] %s269
          %275 = dma.hbm_to_vmem [thread:$0]  %s4, 2048, %s270, [#allocation9], 128, 128, 8
        $region28: #{tpu_custom_call.1} parent=11 // pred_fallthru
          _
        // Predicated region
        $region29: #{tpu_custom_call.1} parent=11 // pred_check
          %p276 = pneg %p153
        $region30: #{tpu_custom_call.1} parent=11 // pred_check_branch
          %278 = sbr.rel (%p276) target = $region32
        $region31: #{tpu_custom_call.1} parent=11 // pred_region
          _
        $region32: #{tpu_custom_call.1} parent=11 // pred_fallthru
          _
        // Predicated region
        $region33: #{tpu_custom_call.1} parent=11 // pred_check
          %p279 = pneg %p174
        $region34: #{tpu_custom_call.1} parent=11 // pred_check_branch
          %281 = sbr.rel (%p279) target = $region36
        $region35: #{tpu_custom_call.1} parent=11 // pred_region
          %s283 = ssub.s32 6144, 6144
          %284 = vsyncadd [#allocation9], %s283
          %s285 = sshll.u32 [#allocation10], 4
          %s286 = int_to_ptr.vmem [resolvable:$true] %s285
          %291 = dma.hbm_to_vmem [thread:$0]  %s6, 6144, %s286, [#allocation9], 384, 384, 24
        $region36: #{tpu_custom_call.1} parent=11 // pred_fallthru
          _
        // Predicated region
        $region37: #{tpu_custom_call.1} parent=11 // pred_check
          %p292 = pneg %p195
        $region38: #{tpu_custom_call.1} parent=11 // pred_check_branch
          %294 = sbr.rel (%p292) target = $region40
        $region39: #{tpu_custom_call.1} parent=11 // pred_region
          _
        $region40: #{tpu_custom_call.1} parent=11 // pred_fallthru
          _
      $region12: #{tpu_custom_call.1} parent=5 // pred_fallthru
        _
      %p295 = scmp.lt.s32.totalorder %s22, 2
      // Predicated region
      $region41: #{tpu_custom_call.1} parent=5 // pred_check
        %p296 = pneg %p295
      $region42: #{tpu_custom_call.1} parent=5 // pred_check_branch
        %298 = sbr.rel (%p296) target = $region44
      $region43: #{tpu_custom_call.1} parent=5 // pred_region
        // Predicated region
        $region45: #{tpu_custom_call.1} parent=43 // pred_check
          %p299 = pneg %p42
        $region46: #{tpu_custom_call.1} parent=43 // pred_check_branch
          %301 = sbr.rel (%p299) target = $region48
        $region47: #{tpu_custom_call.1} parent=43 // pred_region
          %s302 = sand.u32 %s32, 1
          %s303 = scalar_lea.sflag [#allocation3], %s302
          %s304 = sand.u32 %s32, 1
          %s305 = smul.addr %s304, 64
          %s306 = scalar_lea.vmem [#allocation2], %s305
          %s308 = ssub.s32 1024, 1024
          %309 = vsyncadd %s303, %s308
          %s310 = smul.addr %s22, 8
          %s311 = smul.addr %s310, 128
          %s312 = scalar_lea.hbm %s0, %s311
          %s313 = sshll.u32 %s306, 4
          %s314 = int_to_ptr.vmem [resolvable:$true] %s313
          %319 = dma.hbm_to_vmem [thread:$0]  %s312, 1024, %s314, %s303, 128, 128, 8
        $region48: #{tpu_custom_call.1} parent=43 // pred_fallthru
          _
      $region44: #{tpu_custom_call.1} parent=5 // pred_fallthru
        _
      %p320 = scmp.le.s32.totalorder 1, %s22
      %p321 = scmp.lt.s32.totalorder %s22, 3
      %p322 = pnand %p320, %p321
      %p323 = pneg %p322
      // Predicated region
      $region49: #{tpu_custom_call.1} parent=5 // pred_check
        _
      $region50: #{tpu_custom_call.1} parent=5 // pred_check_branch
        %325 = sbr.rel (%p322) target = $region52
      $region51: #{tpu_custom_call.1} parent=5 // pred_region
        %s326 = ssub.s32 %s22, 1
        %s327 = sand.u32 %s35, 1
        %s328 = scalar_lea.sflag [#allocation3], %s327
        %s329 = sand.u32 %s35, 1
        %s330 = smul.addr %s329, 64
        %s331 = scalar_lea.vmem [#allocation2], %s330
        // Predicated region
        $region53: #{tpu_custom_call.1} parent=51 // pred_check
          %p332 = pneg %p48
        $region54: #{tpu_custom_call.1} parent=51 // pred_check_branch
          %334 = sbr.rel (%p332) target = $region56
        $region55: #{tpu_custom_call.1} parent=51 // pred_region
          %335 = dma.done %s328, 1024
        $region56: #{tpu_custom_call.1} parent=51 // pred_fallthru
          _
        // Predicated region
        $region57: #{tpu_custom_call.1} parent=51 // pred_check
          %p336 = pneg %p69
        $region58: #{tpu_custom_call.1} parent=51 // pred_check_branch
          %338 = sbr.rel (%p336) target = $region60
        $region59: #{tpu_custom_call.1} parent=51 // pred_region
          %339 = dma.done [#allocation6], 16
        $region60: #{tpu_custom_call.1} parent=51 // pred_fallthru
          _
        // Predicated region
        $region61: #{tpu_custom_call.1} parent=51 // pred_check
          %p340 = pneg %p90
        $region62: #{tpu_custom_call.1} parent=51 // pred_check_branch
          %342 = sbr.rel (%p340) target = $region64
        $region63: #{tpu_custom_call.1} parent=51 // pred_region
          %343 = dma.done [#allocation6], 6144
        $region64: #{tpu_custom_call.1} parent=51 // pred_fallthru
          _
        // Predicated region
        $region65: #{tpu_custom_call.1} parent=51 // pred_check
          %p344 = pneg %p132
        $region66: #{tpu_custom_call.1} parent=51 // pred_check_branch
          %346 = sbr.rel (%p344) target = $region68
        $region67: #{tpu_custom_call.1} parent=51 // pred_region
          %347 = dma.done [#allocation9], 2048
        $region68: #{tpu_custom_call.1} parent=51 // pred_fallthru
          _
        // Predicated region
        $region69: #{tpu_custom_call.1} parent=51 // pred_check
          %p348 = pneg %p174
        $region70: #{tpu_custom_call.1} parent=51 // pred_check_branch
          %350 = sbr.rel (%p348) target = $region72
        $region71: #{tpu_custom_call.1} parent=51 // pred_region
          %351 = dma.done [#allocation9], 6144
        $region72: #{tpu_custom_call.1} parent=51 // pred_fallthru
          _
        %s352 = sand.u32 %s35, 1
        %s353 = scalar_lea.sflag [#allocation3], %s352
        %s354 = sand.u32 %s35, 1
        %s355 = smul.addr %s354, 64
        %s356 = scalar_lea.vmem [#allocation2], %s355
        %p357 = pneg %p48
        %p358 = pneg %p45
        %p359 = pneg %p69
        %p360 = pneg %p66
        %p361 = pneg %p90
        %p362 = pneg %p87
        %p363 = pneg %p111
        %p364 = pneg %p108
        %p365 = pneg %p132
        %p366 = pneg %p129
        %p367 = pneg %p153
        %p368 = pneg %p150
        %p369 = pneg %p174
        %p370 = pneg %p171
        %p371 = pneg %p195
        %p372 = pneg %p192
        %p373 = pneg %p221
        %p374 = pneg %p218
        %s375 = sand.u32 %s208, 1
        %s376 = scalar_lea.sflag [#allocation4], %s375
        %s377 = sand.u32 %s208, 1
        %s378 = smul.addr %s377, 64
        %s379 = scalar_lea.vmem [#allocation11], %s378
        %v380 = vld [vmem:[%s331] sm:$0xff]
        %v381 = vld [vmem:[%s331 + $0x8] sm:$0xff]
        %v382 = vld [vmem:[%s331 + $0x10] sm:$0xff]
        %v383 = vld [vmem:[%s331 + $0x18] sm:$0xff]
        %v384 = vld [vmem:[%s331 + $0x20] sm:$0xff]
        %v385 = vld [vmem:[%s331 + $0x28] sm:$0xff]
        %v386 = vld [vmem:[%s331 + $0x30] sm:$0xff]
        %v387 = vld [vmem:[%s331 + $0x38] sm:$0xff]
        %v388 = vld [vmem:[#allocation5] sm:$0x1]
        %v389 = vlaneseq
        %v390 = vshrl.u32 %v389, 7
        %v391 = vadd.s32 %v390, 8
        %v392 = vadd.s32 %v390, 16
        %v393 = vadd.s32 %v390, 24
        %v394 = vadd.s32 %v390, 32
        %v395 = vadd.s32 %v390, 40
        %v396 = vadd.s32 %v390, 48
        %v397 = vadd.s32 %v390, 56
        %vm398 = vcmp.ge.s32.totalorder %v390, 4294967280
        %vm399 = vcmp.ge.s32.totalorder %v391, 4294967280
        %vm400 = vcmp.ge.s32.totalorder %v392, 4294967280
        %vm401 = vcmp.ge.s32.totalorder %v393, 4294967280
        %vm402 = vcmp.ge.s32.totalorder %v394, 4294967280
        %vm403 = vcmp.ge.s32.totalorder %v395, 4294967280
        %vm404 = vcmp.ge.s32.totalorder %v396, 4294967280
        %vm405 = vcmp.ge.s32.totalorder %v397, 4294967280
        %vm406 = vcmp.lt.s32.totalorder %v390, 48
        %vm407 = vcmp.lt.s32.totalorder %v391, 48
        %vm408 = vcmp.lt.s32.totalorder %v392, 48
        %vm409 = vcmp.lt.s32.totalorder %v393, 48
        %vm410 = vcmp.lt.s32.totalorder %v394, 48
        %vm411 = vcmp.lt.s32.totalorder %v395, 48
        %vm412 = vcmp.lt.s32.totalorder %v396, 48
        %vm413 = vcmp.lt.s32.totalorder %v397, 48
        %vm414 = vmand %vm398, %vm406
        %vm415 = vmand %vm399, %vm407
        %vm416 = vmand %vm400, %vm408
        %vm417 = vmand %vm401, %vm409
        %vm418 = vmand %vm402, %vm410
        %vm419 = vmand %vm403, %vm411
        %vm420 = vmand %vm404, %vm412
        %vm421 = vmand %vm405, %vm413
        %v422 = vsel %vm414, 1, 0
        %v423 = vsel %vm415, 1, 0
        %v424 = vsel %vm416, 1, 0
        %v425 = vsel %vm417, 1, 0
        %v426 = vsel %vm418, 1, 0
        %v427 = vsel %vm419, 1, 0
        %v428 = vsel %vm420, 1, 0
        %v429 = vsel %vm421, 1, 0
        %v430 = vcvt.s32.f32 %v422
        %v431 = vcvt.s32.f32 %v423
        %v432 = vcvt.s32.f32 %v424
        %v433 = vcvt.s32.f32 %v425
        %v434 = vcvt.s32.f32 %v426
        %v435 = vcvt.s32.f32 %v427
        %v436 = vcvt.s32.f32 %v428
        %v437 = vcvt.s32.f32 %v429
        %vm438 = vcmp.eq.s32.totalorder %v388, 4294967294
        %v439 = vsel %vm438, 1, 0
        %v440 = vcvt.s32.f32 %v439
        %v441 = vmul.f32 %v382, %v430
        %v442 = vmul.f32 %v383, %v431
        %v443 = vmul.f32 %v384, %v432
        %v444 = vmul.f32 %v385, %v433
        %v445 = vmul.f32 %v386, %v434
        %v446 = vmul.f32 %v387, %v435
        %v447 = vmul.f32 %v380, %v436
        %v448 = vmul.f32 %v381, %v437
        %v450 = vlaneseq
        %v451 = vshrl.u32 %v450, 7
        %v452 = vsub.s32 0, %v451
        %v453 = vrot.slane %v440, %v452
        %v455 = vmul.f32 %v441, %v453
        %v456 = vmul.f32 %v442, %v453
        %v457 = vmul.f32 %v443, %v453
        %v458 = vmul.f32 %v444, %v453
        %v459 = vmul.f32 %v445, %v453
        %v460 = vmul.f32 %v446, %v453
        %v461 = vmul.f32 %v447, %v453
        %v462 = vmul.f32 %v448, %v453
        %v463 = vadd.f32 %v455, 0.0
        %v464 = vadd.f32 %v456, 0.0
        %v465 = vadd.f32 %v457, 0.0
        %v466 = vadd.f32 %v458, 0.0
        %v467 = vadd.f32 %v459, 0.0
        %v468 = vadd.f32 %v460, 0.0
        %v469 = vadd.f32 %v461, 0.0
        %v470 = vadd.f32 %v462, 0.0
        %vm471 = vcmp.ge.s32.totalorder %v390, 4294967288
        %vm472 = vcmp.ge.s32.totalorder %v391, 4294967288
        %vm473 = vcmp.ge.s32.totalorder %v392, 4294967288
        %vm474 = vcmp.ge.s32.totalorder %v393, 4294967288
        %vm475 = vcmp.ge.s32.totalorder %v394, 4294967288
        %vm476 = vcmp.ge.s32.totalorder %v395, 4294967288
        %vm477 = vcmp.ge.s32.totalorder %v396, 4294967288
        %vm478 = vcmp.ge.s32.totalorder %v397, 4294967288
        %vm479 = vcmp.lt.s32.totalorder %v390, 56
        %vm480 = vcmp.lt.s32.totalorder %v391, 56
        %vm481 = vcmp.lt.s32.totalorder %v392, 56
        %vm482 = vcmp.lt.s32.totalorder %v393, 56
        %vm483 = vcmp.lt.s32.totalorder %v394, 56
        %vm484 = vcmp.lt.s32.totalorder %v395, 56
        %vm485 = vcmp.lt.s32.totalorder %v396, 56
        %vm486 = vcmp.lt.s32.totalorder %v397, 56
        %vm487 = vmand %vm471, %vm479
        %vm488 = vmand %vm472, %vm480
        %vm489 = vmand %vm473, %vm481
        %vm490 = vmand %vm474, %vm482
        %vm491 = vmand %vm475, %vm483
        %vm492 = vmand %vm476, %vm484
        %vm493 = vmand %vm477, %vm485
        %vm494 = vmand %vm478, %vm486
        %v495 = vsel %vm487, 1, 0
        %v496 = vsel %vm488, 1, 0
        %v497 = vsel %vm489, 1, 0
        %v498 = vsel %vm490, 1, 0
        %v499 = vsel %vm491, 1, 0
        %v500 = vsel %vm492, 1, 0
        %v501 = vsel %vm493, 1, 0
        %v502 = vsel %vm494, 1, 0
        %v503 = vcvt.s32.f32 %v495
        %v504 = vcvt.s32.f32 %v496
        %v505 = vcvt.s32.f32 %v497
        %v506 = vcvt.s32.f32 %v498
        %v507 = vcvt.s32.f32 %v499
        %v508 = vcvt.s32.f32 %v500
        %v509 = vcvt.s32.f32 %v501
        %v510 = vcvt.s32.f32 %v502
        %vm511 = vcmp.eq.s32.totalorder %v388, 4294967295
        %v512 = vsel %vm511, 1, 0
        %v513 = vcvt.s32.f32 %v512
        %v514 = vmul.f32 %v381, %v503
        %v515 = vmul.f32 %v382, %v504
        %v516 = vmul.f32 %v383, %v505
        %v517 = vmul.f32 %v384, %v506
        %v518 = vmul.f32 %v385, %v507
        %v519 = vmul.f32 %v386, %v508
        %v520 = vmul.f32 %v387, %v509
        %v521 = vmul.f32 %v380, %v510
        %v523 = vlaneseq
        %v524 = vshrl.u32 %v523, 7
        %v525 = vsub.s32 0, %v524
        %v526 = vrot.slane %v513, %v525
        %v528 = vmul.f32 %v514, %v526
        %v529 = vmul.f32 %v515, %v526
        %v530 = vmul.f32 %v516, %v526
        %v531 = vmul.f32 %v517, %v526
        %v532 = vmul.f32 %v518, %v526
        %v533 = vmul.f32 %v519, %v526
        %v534 = vmul.f32 %v520, %v526
        %v535 = vmul.f32 %v521, %v526
        %v536 = vadd.f32 %v463, %v528
        %v537 = vadd.f32 %v464, %v529
        %v538 = vadd.f32 %v465, %v530
        %v539 = vadd.f32 %v466, %v531
        %v540 = vadd.f32 %v467, %v532
        %v541 = vadd.f32 %v468, %v533
        %v542 = vadd.f32 %v469, %v534
        %v543 = vadd.f32 %v470, %v535
        %vm544 = vcmp.ge.s32.totalorder %v390, 0
        %vm545 = vcmp.ge.s32.totalorder %v391, 0
        %vm546 = vcmp.ge.s32.totalorder %v392, 0
        %vm547 = vcmp.ge.s32.totalorder %v393, 0
        %vm548 = vcmp.ge.s32.totalorder %v394, 0
        %vm549 = vcmp.ge.s32.totalorder %v395, 0
        %vm550 = vcmp.ge.s32.totalorder %v396, 0
        %vm551 = vcmp.ge.s32.totalorder %v397, 0
        %vm552 = vcmp.lt.s32.totalorder %v390, 64
        %vm553 = vcmp.lt.s32.totalorder %v391, 64
        %vm554 = vcmp.lt.s32.totalorder %v392, 64
        %vm555 = vcmp.lt.s32.totalorder %v393, 64
        %vm556 = vcmp.lt.s32.totalorder %v394, 64
        %vm557 = vcmp.lt.s32.totalorder %v395, 64
        %vm558 = vcmp.lt.s32.totalorder %v396, 64
        %vm559 = vcmp.lt.s32.totalorder %v397, 64
        %vm560 = vmand %vm544, %vm552
        %vm561 = vmand %vm545, %vm553
        %vm562 = vmand %vm546, %vm554
        %vm563 = vmand %vm547, %vm555
        %vm564 = vmand %vm548, %vm556
        %vm565 = vmand %vm549, %vm557
        %vm566 = vmand %vm550, %vm558
        %vm567 = vmand %vm551, %vm559
        %v568 = vsel %vm560, 1, 0
        %v569 = vsel %vm561, 1, 0
        %v570 = vsel %vm562, 1, 0
        %v571 = vsel %vm563, 1, 0
        %v572 = vsel %vm564, 1, 0
        %v573 = vsel %vm565, 1, 0
        %v574 = vsel %vm566, 1, 0
        %v575 = vsel %vm567, 1, 0
        %v576 = vcvt.s32.f32 %v568
        %v577 = vcvt.s32.f32 %v569
        %v578 = vcvt.s32.f32 %v570
        %v579 = vcvt.s32.f32 %v571
        %v580 = vcvt.s32.f32 %v572
        %v581 = vcvt.s32.f32 %v573
        %v582 = vcvt.s32.f32 %v574
        %v583 = vcvt.s32.f32 %v575
        %vm584 = vcmp.eq.s32.totalorder %v388, 0
        %v585 = vsel %vm584, 1, 0
        %v586 = vcvt.s32.f32 %v585
        %v587 = vmul.f32 %v380, %v576
        %v588 = vmul.f32 %v381, %v577
        %v589 = vmul.f32 %v382, %v578
        %v590 = vmul.f32 %v383, %v579
        %v591 = vmul.f32 %v384, %v580
        %v592 = vmul.f32 %v385, %v581
        %v593 = vmul.f32 %v386, %v582
        %v594 = vmul.f32 %v387, %v583
        %v596 = vlaneseq
        %v597 = vshrl.u32 %v596, 7
        %v598 = vsub.s32 0, %v597
        %v599 = vrot.slane %v586, %v598
        %v601 = vmul.f32 %v587, %v599
        %v602 = vmul.f32 %v588, %v599
        %v603 = vmul.f32 %v589, %v599
        %v604 = vmul.f32 %v590, %v599
        %v605 = vmul.f32 %v591, %v599
        %v606 = vmul.f32 %v592, %v599
        %v607 = vmul.f32 %v593, %v599
        %v608 = vmul.f32 %v594, %v599
        %v609 = vadd.f32 %v536, %v601
        %v610 = vadd.f32 %v537, %v602
        %v611 = vadd.f32 %v538, %v603
        %v612 = vadd.f32 %v539, %v604
        %v613 = vadd.f32 %v540, %v605
        %v614 = vadd.f32 %v541, %v606
        %v615 = vadd.f32 %v542, %v607
        %v616 = vadd.f32 %v543, %v608
        %vm617 = vcmp.ge.s32.totalorder %v390, 8
        %vm618 = vcmp.ge.s32.totalorder %v391, 8
        %vm619 = vcmp.ge.s32.totalorder %v392, 8
        %vm620 = vcmp.ge.s32.totalorder %v393, 8
        %vm621 = vcmp.ge.s32.totalorder %v394, 8
        %vm622 = vcmp.ge.s32.totalorder %v395, 8
        %vm623 = vcmp.ge.s32.totalorder %v396, 8
        %vm624 = vcmp.ge.s32.totalorder %v397, 8
        %vm625 = vcmp.lt.s32.totalorder %v390, 72
        %vm626 = vcmp.lt.s32.totalorder %v391, 72
        %vm627 = vcmp.lt.s32.totalorder %v392, 72
        %vm628 = vcmp.lt.s32.totalorder %v393, 72
        %vm629 = vcmp.lt.s32.totalorder %v394, 72
        %vm630 = vcmp.lt.s32.totalorder %v395, 72
        %vm631 = vcmp.lt.s32.totalorder %v396, 72
        %vm632 = vcmp.lt.s32.totalorder %v397, 72
        %vm633 = vmand %vm617, %vm625
        %vm634 = vmand %vm618, %vm626
        %vm635 = vmand %vm619, %vm627
        %vm636 = vmand %vm620, %vm628
        %vm637 = vmand %vm621, %vm629
        %vm638 = vmand %vm622, %vm630
        %vm639 = vmand %vm623, %vm631
        %vm640 = vmand %vm624, %vm632
        %v641 = vsel %vm633, 1, 0
        %v642 = vsel %vm634, 1, 0
        %v643 = vsel %vm635, 1, 0
        %v644 = vsel %vm636, 1, 0
        %v645 = vsel %vm637, 1, 0
        %v646 = vsel %vm638, 1, 0
        %v647 = vsel %vm639, 1, 0
        %v648 = vsel %vm640, 1, 0
        %v649 = vcvt.s32.f32 %v641
        %v650 = vcvt.s32.f32 %v642
        %v651 = vcvt.s32.f32 %v643
        %v652 = vcvt.s32.f32 %v644
        %v653 = vcvt.s32.f32 %v645
        %v654 = vcvt.s32.f32 %v646
        %v655 = vcvt.s32.f32 %v647
        %v656 = vcvt.s32.f32 %v648
        %vm657 = vcmp.eq.s32.totalorder %v388, 1
        %v658 = vsel %vm657, 1, 0
        %v659 = vcvt.s32.f32 %v658
        %v660 = vmul.f32 %v387, %v649
        %v661 = vmul.f32 %v380, %v650
        %v662 = vmul.f32 %v381, %v651
        %v663 = vmul.f32 %v382, %v652
        %v664 = vmul.f32 %v383, %v653
        %v665 = vmul.f32 %v384, %v654
        %v666 = vmul.f32 %v385, %v655
        %v667 = vmul.f32 %v386, %v656
        %v669 = vlaneseq
        %v670 = vshrl.u32 %v669, 7
        %v671 = vsub.s32 0, %v670
        %v672 = vrot.slane %v659, %v671
        %v674 = vmul.f32 %v660, %v672
        %v675 = vmul.f32 %v661, %v672
        %v676 = vmul.f32 %v662, %v672
        %v677 = vmul.f32 %v663, %v672
        %v678 = vmul.f32 %v664, %v672
        %v679 = vmul.f32 %v665, %v672
        %v680 = vmul.f32 %v666, %v672
        %v681 = vmul.f32 %v667, %v672
        %v682 = vadd.f32 %v609, %v674
        %v683 = vadd.f32 %v610, %v675
        %v684 = vadd.f32 %v611, %v676
        %v685 = vadd.f32 %v612, %v677
        %v686 = vadd.f32 %v613, %v678
        %v687 = vadd.f32 %v614, %v679
        %v688 = vadd.f32 %v615, %v680
        %v689 = vadd.f32 %v616, %v681
        %vm690 = vcmp.ge.s32.totalorder %v390, 16
        %vm691 = vcmp.ge.s32.totalorder %v391, 16
        %vm692 = vcmp.ge.s32.totalorder %v392, 16
        %vm693 = vcmp.ge.s32.totalorder %v393, 16
        %vm694 = vcmp.ge.s32.totalorder %v394, 16
        %vm695 = vcmp.ge.s32.totalorder %v395, 16
        %vm696 = vcmp.ge.s32.totalorder %v396, 16
        %vm697 = vcmp.ge.s32.totalorder %v397, 16
        %vm698 = vcmp.lt.s32.totalorder %v390, 80
        %vm699 = vcmp.lt.s32.totalorder %v391, 80
        %vm700 = vcmp.lt.s32.totalorder %v392, 80
        %vm701 = vcmp.lt.s32.totalorder %v393, 80
        %vm702 = vcmp.lt.s32.totalorder %v394, 80
        %vm703 = vcmp.lt.s32.totalorder %v395, 80
        %vm704 = vcmp.lt.s32.totalorder %v396, 80
        %vm705 = vcmp.lt.s32.totalorder %v397, 80
        %vm706 = vmand %vm690, %vm698
        %vm707 = vmand %vm691, %vm699
        %vm708 = vmand %vm692, %vm700
        %vm709 = vmand %vm693, %vm701
        %vm710 = vmand %vm694, %vm702
        %vm711 = vmand %vm695, %vm703
        %vm712 = vmand %vm696, %vm704
        %vm713 = vmand %vm697, %vm705
        %v714 = vsel %vm706, 1, 0
        %v715 = vsel %vm707, 1, 0
        %v716 = vsel %vm708, 1, 0
        %v717 = vsel %vm709, 1, 0
        %v718 = vsel %vm710, 1, 0
        %v719 = vsel %vm711, 1, 0
        %v720 = vsel %vm712, 1, 0
        %v721 = vsel %vm713, 1, 0
        %v722 = vcvt.s32.f32 %v714
        %v723 = vcvt.s32.f32 %v715
        %v724 = vcvt.s32.f32 %v716
        %v725 = vcvt.s32.f32 %v717
        %v726 = vcvt.s32.f32 %v718
        %v727 = vcvt.s32.f32 %v719
        %v728 = vcvt.s32.f32 %v720
        %v729 = vcvt.s32.f32 %v721
        %vm730 = vcmp.eq.s32.totalorder %v388, 2
        %v731 = vsel %vm730, 1, 0
        %v732 = vcvt.s32.f32 %v731
        %v733 = vmul.f32 %v386, %v722
        %v734 = vmul.f32 %v387, %v723
        %v735 = vmul.f32 %v380, %v724
        %v736 = vmul.f32 %v381, %v725
        %v737 = vmul.f32 %v382, %v726
        %v738 = vmul.f32 %v383, %v727
        %v739 = vmul.f32 %v384, %v728
        %v740 = vmul.f32 %v385, %v729
        %v742 = vlaneseq
        %v743 = vshrl.u32 %v742, 7
        %v744 = vsub.s32 0, %v743
        %v745 = vrot.slane %v732, %v744
        %v747 = vmul.f32 %v733, %v745
        %v748 = vmul.f32 %v734, %v745
        %v749 = vmul.f32 %v735, %v745
        %v750 = vmul.f32 %v736, %v745
        %v751 = vmul.f32 %v737, %v745
        %v752 = vmul.f32 %v738, %v745
        %v753 = vmul.f32 %v739, %v745
        %v754 = vmul.f32 %v740, %v745
        %v755 = vadd.f32 %v682, %v747
        %v756 = vadd.f32 %v683, %v748
        %v757 = vadd.f32 %v684, %v749
        %v758 = vadd.f32 %v685, %v750
        %v759 = vadd.f32 %v686, %v751
        %v760 = vadd.f32 %v687, %v752
        %v761 = vadd.f32 %v688, %v753
        %v762 = vadd.f32 %v689, %v754
        %v763 = vld [vmem:[#allocation7] sm:$0xff]
        %v764 = vld [vmem:[#allocation7 + $0x8] sm:$0xff]
        %v765 = vld [vmem:[#allocation7 + $0x10] sm:$0xff]
        %v766 = vld [vmem:[#allocation7 + $0x18] sm:$0xff]
        %v767 = vld [vmem:[#allocation7 + $0x20] sm:$0xff]
        %v768 = vld [vmem:[#allocation7 + $0x28] sm:$0xff]
        %v769 = vld [vmem:[#allocation7 + $0x30] sm:$0xff]
        %v770 = vld [vmem:[#allocation7 + $0x38] sm:$0xff]
        %v771 = vld [vmem:[#allocation7 + $0x40] sm:$0xff]
        %v772 = vld [vmem:[#allocation7 + $0x48] sm:$0xff]
        %v773 = vld [vmem:[#allocation7 + $0x50] sm:$0xff]
        %v774 = vld [vmem:[#allocation7 + $0x58] sm:$0xff]
        %v775 = vld [vmem:[#allocation7 + $0x60] sm:$0xff]
        %v776 = vld [vmem:[#allocation7 + $0x68] sm:$0xff]
        %v777 = vld [vmem:[#allocation7 + $0x70] sm:$0xff]
        %v778 = vld [vmem:[#allocation7 + $0x78] sm:$0xff]
        %v779 = vld [vmem:[#allocation7 + $0x80] sm:$0xff]
        %v780 = vld [vmem:[#allocation7 + $0x88] sm:$0xff]
        %v781 = vld [vmem:[#allocation7 + $0x90] sm:$0xff]
        %v782 = vld [vmem:[#allocation7 + $0x98] sm:$0xff]
        %v783 = vld [vmem:[#allocation7 + $0xa0] sm:$0xff]
        %v784 = vld [vmem:[#allocation7 + $0xa8] sm:$0xff]
        %v785 = vld [vmem:[#allocation7 + $0xb0] sm:$0xff]
        %v786 = vld [vmem:[#allocation7 + $0xb8] sm:$0xff]
        %v787 = vld [vmem:[#allocation7 + $0xc0] sm:$0xff]
        %v788 = vld [vmem:[#allocation7 + $0xc8] sm:$0xff]
        %v789 = vld [vmem:[#allocation7 + $0xd0] sm:$0xff]
        %v790 = vld [vmem:[#allocation7 + $0xd8] sm:$0xff]
        %v791 = vld [vmem:[#allocation7 + $0xe0] sm:$0xff]
        %v792 = vld [vmem:[#allocation7 + $0xe8] sm:$0xff]
        %v793 = vld [vmem:[#allocation7 + $0xf0] sm:$0xff]
        %v794 = vld [vmem:[#allocation7 + $0xf8] sm:$0xff]
        %v795 = vld [vmem:[%s3] sm:$0x1]
        %v796 = vld [vmem:[%s3 + $0x1] sm:$0x1]
        %v797 = vld [vmem:[%s3 + $0x2] sm:$0x1]
        %vm798 = vcmask 523264
        %v800 = vsel %vm798, 0.015625, 0
        %802 = vmatprep.subr.mxu0 %v380
        %803 = vmatpush1.msra.mxu0 %v755
        %804 = vmatprep.subr.mxu0 %v381
        %805 = vmatpush1.msra.mxu0 %v756
        %806 = vmatprep.subr.mxu0 %v382
        %807 = vmatpush1.msra.mxu0 %v757
        %808 = vmatprep.subr.mxu0 %v383
        %809 = vmatpush1.msra.mxu0 %v758
        %810 = vmatprep.subr.mxu0 %v384
        %811 = vmatpush1.msra.mxu0 %v759
        %812 = vmatprep.subr.mxu0 %v385
        %813 = vmatpush1.msra.mxu0 %v760
        %814 = vmatprep.subr.mxu0 %v386
        %815 = vmatpush1.msra.mxu0 %v761
        %816 = vmatprep.subr.mxu0 %v387
        %817 = vmatpush1.msra.mxu0 %v762
        %818 = vmatprep.subr.mxu0 0.0
        %819 = vmatpush1.msra.mxu0 0.0
        %820 = vmatprep.subr.mxu0 0.0
        %821 = vmatpush1.msra.mxu0 0.0
        %822 = vmatprep.subr.mxu0 0.0
        %823 = vmatpush1.msra.mxu0 0.0
        %824 = vmatprep.subr.mxu0 0.0
        %825 = vmatpush1.msra.mxu0 0.0
        %826 = vmatprep.subr.mxu0 0.0
        %827 = vmatpush1.msra.mxu0 0.0
        %828 = vmatprep.subr.mxu0 0.0
        %829 = vmatpush1.msra.mxu0 0.0
        %830 = vmatprep.subr.mxu0 0.0
        %831 = vmatpush1.msra.mxu0 0.0
        %832 = vmatprep.subr.mxu0 0.0
        %833 = vmatpush1.msra.mxu0 0.0
        %834 = vmatprep.subr.mxu0 0.0
        %835 = vmatpush1.msra.mxu0 0.0
        %836 = vmatprep.subr.mxu0 0.0
        %837 = vmatpush1.msra.mxu0 0.0
        %838 = vmatprep.subr.mxu0 0.0
        %839 = vmatpush1.msra.mxu0 0.0
        %840 = vmatprep.subr.mxu0 0.0
        %841 = vmatpush1.msra.mxu0 0.0
        %842 = vmatprep.subr.mxu0 0.0
        %843 = vmatpush1.msra.mxu0 0.0
        %844 = vmatprep.subr.mxu0 0.0
        %845 = vmatpush1.msra.mxu0 0.0
        %846 = vmatprep.subr.mxu0 0.0
        %847 = vmatpush1.msra.mxu0 0.0
        %848 = vmatprep.subr.mxu0 0.0
        %849 = vmatpush1.msra.mxu0 0.0
        %850 = vmatprep.subr.mxu0 0.0
        %851 = vmatpush1.msra.mxu0 0.0
        %852 = vmatprep.subr.mxu0 0.0
        %853 = vmatpush1.msra.mxu0 0.0
        %854 = vmatprep.subr.mxu0 0.0
        %855 = vmatpush1.msra.mxu0 0.0
        %856 = vmatprep.subr.mxu0 0.0
        %857 = vmatpush1.msra.mxu0 0.0
        %858 = vmatprep.subr.mxu0 0.0
        %859 = vmatpush1.msra.mxu0 0.0
        %860 = vmatprep.subr.mxu0 0.0
        %861 = vmatpush1.msra.mxu0 0.0
        %862 = vmatprep.subr.mxu0 0.0
        %863 = vmatpush1.msra.mxu0 0.0
        %864 = vmatprep.subr.mxu0 0.0
        %865 = vmatpush1.msra.mxu0 0.0
        %866 = vmatprep.mubr.f32.mxu0 0.0
        %867 = vmatmul.mubr.f32.gmra.mrb[0].mxu0 %v800
        %v868 = vpop.f32.mrb[0].mxu0
        %v869 = vadd.f32 0.0, %v868
        %v870 = vpop.f32.mrb[0].mxu0
        %v871 = vadd.f32 0.0, %v870
        %872 = vdwg.mxu0
        %873 = vmatprep.subr.mxu0 0.0
        %874 = vmatpush1.msra.mxu0 %v763
        %875 = vmatprep.subr.mxu0 0.0
        %876 = vmatpush1.msra.mxu0 %v764
        %877 = vmatprep.subr.mxu0 0.0
        %878 = vmatpush1.msra.mxu0 %v765
        %879 = vmatprep.subr.mxu0 0.0
        %880 = vmatpush1.msra.mxu0 %v766
        %881 = vmatprep.subr.mxu0 0.0
        %882 = vmatpush1.msra.mxu0 %v767
        %883 = vmatprep.subr.mxu0 0.0
        %884 = vmatpush1.msra.mxu0 %v768
        %885 = vmatprep.subr.mxu0 0.0
        %886 = vmatpush1.msra.mxu0 %v769
        %887 = vmatprep.subr.mxu0 0.0
        %888 = vmatpush1.msra.mxu0 %v770
        %889 = vmatprep.subr.mxu0 0.0
        %890 = vmatpush1.msra.mxu0 %v771
        %891 = vmatprep.subr.mxu0 0.0
        %892 = vmatpush1.msra.mxu0 %v772
        %893 = vmatprep.subr.mxu0 0.0
        %894 = vmatpush1.msra.mxu0 %v773
        %895 = vmatprep.subr.mxu0 0.0
        %896 = vmatpush1.msra.mxu0 %v774
        %897 = vmatprep.subr.mxu0 0.0
        %898 = vmatpush1.msra.mxu0 %v775
        %899 = vmatprep.subr.mxu0 0.0
        %900 = vmatpush1.msra.mxu0 %v776
        %901 = vmatprep.subr.mxu0 0.0
        %902 = vmatpush1.msra.mxu0 %v777
        %903 = vmatprep.subr.mxu0 0.0
        %904 = vmatpush1.msra.mxu0 %v778
        %905 = vmatprep.subr.mxu0 0.0
        %906 = vmatpush1.msra.mxu0 0.0
        %907 = vmatprep.subr.mxu0 0.0
        %908 = vmatpush1.msra.mxu0 0.0
        %909 = vmatprep.subr.mxu0 0.0
        %910 = vmatpush1.msra.mxu0 0.0
        %911 = vmatprep.subr.mxu0 0.0
        %912 = vmatpush1.msra.mxu0 0.0
        %913 = vmatprep.subr.mxu0 0.0
        %914 = vmatpush1.msra.mxu0 0.0
        %915 = vmatprep.subr.mxu0 0.0
        %916 = vmatpush1.msra.mxu0 0.0
        %917 = vmatprep.subr.mxu0 0.0
        %918 = vmatpush1.msra.mxu0 0.0
        %919 = vmatprep.subr.mxu0 0.0
        %920 = vmatpush1.msra.mxu0 0.0
        %921 = vmatprep.subr.mxu0 0.0
        %922 = vmatpush1.msra.mxu0 0.0
        %923 = vmatprep.subr.mxu0 0.0
        %924 = vmatpush1.msra.mxu0 0.0
        %925 = vmatprep.subr.mxu0 0.0
        %926 = vmatpush1.msra.mxu0 0.0
        %927 = vmatprep.subr.mxu0 0.0
        %928 = vmatpush1.msra.mxu0 0.0
        %929 = vmatprep.subr.mxu0 0.0
        %930 = vmatpush1.msra.mxu0 0.0
        %931 = vmatprep.subr.mxu0 0.0
        %932 = vmatpush1.msra.mxu0 0.0
        %933 = vmatprep.subr.mxu0 0.0
        %934 = vmatpush1.msra.mxu0 0.0
        %935 = vmatprep.subr.mxu0 0.0
        %936 = vmatpush1.msra.mxu0 0.0
        %937 = vmatprep.mubr.f32.mxu0 0.0
        %938 = vmatmul.mubr.f32.gmra.mrb[0].mxu0 %v869
        %v939 = vpop.f32.mrb[0].mxu0
        %v940 = vadd.f32 %v795, %v939
        %v941 = vpop.f32.mrb[0].mxu0
        %942 = vdwg.mxu0
        %943 = vmatprep.subr.mxu0 0.0
        %944 = vmatpush1.msra.mxu0 %v779
        %945 = vmatprep.subr.mxu0 0.0
        %946 = vmatpush1.msra.mxu0 %v780
        %947 = vmatprep.subr.mxu0 0.0
        %948 = vmatpush1.msra.mxu0 %v781
        %949 = vmatprep.subr.mxu0 0.0
        %950 = vmatpush1.msra.mxu0 %v782
        %951 = vmatprep.subr.mxu0 0.0
        %952 = vmatpush1.msra.mxu0 %v783
        %953 = vmatprep.subr.mxu0 0.0
        %954 = vmatpush1.msra.mxu0 %v784
        %955 = vmatprep.subr.mxu0 0.0
        %956 = vmatpush1.msra.mxu0 %v785
        %957 = vmatprep.subr.mxu0 0.0
        %958 = vmatpush1.msra.mxu0 %v786
        %959 = vmatprep.subr.mxu0 0.0
        %960 = vmatpush1.msra.mxu0 %v787
        %961 = vmatprep.subr.mxu0 0.0
        %962 = vmatpush1.msra.mxu0 %v788
        %963 = vmatprep.subr.mxu0 0.0
        %964 = vmatpush1.msra.mxu0 %v789
        %965 = vmatprep.subr.mxu0 0.0
        %966 = vmatpush1.msra.mxu0 %v790
        %967 = vmatprep.subr.mxu0 0.0
        %968 = vmatpush1.msra.mxu0 %v791
        %969 = vmatprep.subr.mxu0 0.0
        %970 = vmatpush1.msra.mxu0 %v792
        %971 = vmatprep.subr.mxu0 0.0
        %972 = vmatpush1.msra.mxu0 %v793
        %973 = vmatprep.subr.mxu0 0.0
        %974 = vmatpush1.msra.mxu0 %v794
        %975 = vmatprep.subr.mxu0 0.0
        %976 = vmatpush1.msra.mxu0 0.0
        %977 = vmatprep.subr.mxu0 0.0
        %978 = vmatpush1.msra.mxu0 0.0
        %979 = vmatprep.subr.mxu0 0.0
        %980 = vmatpush1.msra.mxu0 0.0
        %981 = vmatprep.subr.mxu0 0.0
        %982 = vmatpush1.msra.mxu0 0.0
        %983 = vmatprep.subr.mxu0 0.0
        %984 = vmatpush1.msra.mxu0 0.0
        %985 = vmatprep.subr.mxu0 0.0
        %986 = vmatpush1.msra.mxu0 0.0
        %987 = vmatprep.subr.mxu0 0.0
        %988 = vmatpush1.msra.mxu0 0.0
        %989 = vmatprep.subr.mxu0 0.0
        %990 = vmatpush1.msra.mxu0 0.0
        %991 = vmatprep.subr.mxu0 0.0
        %992 = vmatpush1.msra.mxu0 0.0
        %993 = vmatprep.subr.mxu0 0.0
        %994 = vmatpush1.msra.mxu0 0.0
        %995 = vmatprep.subr.mxu0 0.0
        %996 = vmatpush1.msra.mxu0 0.0
        %997 = vmatprep.subr.mxu0 0.0
        %998 = vmatpush1.msra.mxu0 0.0
        %999 = vmatprep.subr.mxu0 0.0
        %1000 = vmatpush1.msra.mxu0 0.0
        %1001 = vmatprep.subr.mxu0 0.0
        %1002 = vmatpush1.msra.mxu0 0.0
        %1003 = vmatprep.subr.mxu0 0.0
        %1004 = vmatpush1.msra.mxu0 0.0
        %1005 = vmatprep.subr.mxu0 0.0
        %1006 = vmatpush1.msra.mxu0 0.0
        %1007 = vmatprep.mubr.f32.mxu0 0.0
        %1008 = vmatmul.mubr.f32.gmra.mrb[0].mxu0 %v871
        %v1009 = vpop.f32.mrb[0].mxu0
        %v1010 = vadd.f32 %v796, %v1009
        %v1011 = vpop.f32.mrb[0].mxu0
        %1012 = vdwg.mxu0
        %v1013 = vmul.f32 %v940, 2.0
        %v1014 = vadd.f32 %v1013, %v1010
        %v1015 = vld [vmem:[#allocation8] sm:$0xff]
        %v1016 = vld [vmem:[#allocation8 + $0x8] sm:$0xff]
        %v1017 = vld [vmem:[#allocation8 + $0x10] sm:$0xff]
        %v1018 = vld [vmem:[#allocation8 + $0x18] sm:$0xff]
        %v1019 = vld [vmem:[#allocation8 + $0x20] sm:$0xff]
        %v1020 = vld [vmem:[#allocation8 + $0x28] sm:$0xff]
        %v1021 = vld [vmem:[#allocation8 + $0x30] sm:$0xff]
        %v1022 = vld [vmem:[#allocation8 + $0x38] sm:$0xff]
        %v1023 = vld [vmem:[#allocation8 + $0x40] sm:$0xff]
        %v1024 = vld [vmem:[#allocation8 + $0x48] sm:$0xff]
        %v1025 = vld [vmem:[#allocation8 + $0x50] sm:$0xff]
        %v1026 = vld [vmem:[#allocation8 + $0x58] sm:$0xff]
        %v1027 = vld [vmem:[#allocation8 + $0x60] sm:$0xff]
        %v1028 = vld [vmem:[#allocation8 + $0x68] sm:$0xff]
        %v1029 = vld [vmem:[#allocation8 + $0x70] sm:$0xff]
        %v1030 = vld [vmem:[#allocation8 + $0x78] sm:$0xff]
        %v1031 = vld [vmem:[%s5] sm:$0x1]
        %1032 = vmatprep.subr.mxu0 0.0
        %1033 = vmatpush1.msra.mxu0 %v1015
        %1034 = vmatprep.subr.mxu0 0.0
        %1035 = vmatpush1.msra.mxu0 %v1016
        %1036 = vmatprep.subr.mxu0 0.0
        %1037 = vmatpush1.msra.mxu0 %v1017
        %1038 = vmatprep.subr.mxu0 0.0
        %1039 = vmatpush1.msra.mxu0 %v1018
        %1040 = vmatprep.subr.mxu0 0.0
        %1041 = vmatpush1.msra.mxu0 %v1019
        %1042 = vmatprep.subr.mxu0 0.0
        %1043 = vmatpush1.msra.mxu0 %v1020
        %1044 = vmatprep.subr.mxu0 0.0
        %1045 = vmatpush1.msra.mxu0 %v1021
        %1046 = vmatprep.subr.mxu0 0.0
        %1047 = vmatpush1.msra.mxu0 %v1022
        %1048 = vmatprep.subr.mxu0 0.0
        %1049 = vmatpush1.msra.mxu0 %v1023
        %1050 = vmatprep.subr.mxu0 0.0
        %1051 = vmatpush1.msra.mxu0 %v1024
        %1052 = vmatprep.subr.mxu0 0.0
        %1053 = vmatpush1.msra.mxu0 %v1025
        %1054 = vmatprep.subr.mxu0 0.0
        %1055 = vmatpush1.msra.mxu0 %v1026
        %1056 = vmatprep.subr.mxu0 0.0
        %1057 = vmatpush1.msra.mxu0 %v1027
        %1058 = vmatprep.subr.mxu0 0.0
        %1059 = vmatpush1.msra.mxu0 %v1028
        %1060 = vmatprep.subr.mxu0 0.0
        %1061 = vmatpush1.msra.mxu0 %v1029
        %1062 = vmatprep.subr.mxu0 0.0
        %1063 = vmatpush1.msra.mxu0 %v1030
        %1064 = vmatprep.subr.mxu0 0.0
        %1065 = vmatpush1.msra.mxu0 0.0
        %1066 = vmatprep.subr.mxu0 0.0
        %1067 = vmatpush1.msra.mxu0 0.0
        %1068 = vmatprep.subr.mxu0 0.0
        %1069 = vmatpush1.msra.mxu0 0.0
        %1070 = vmatprep.subr.mxu0 0.0
        %1071 = vmatpush1.msra.mxu0 0.0
        %1072 = vmatprep.subr.mxu0 0.0
        %1073 = vmatpush1.msra.mxu0 0.0
        %1074 = vmatprep.subr.mxu0 0.0
        %1075 = vmatpush1.msra.mxu0 0.0
        %1076 = vmatprep.subr.mxu0 0.0
        %1077 = vmatpush1.msra.mxu0 0.0
        %1078 = vmatprep.subr.mxu0 0.0
        %1079 = vmatpush1.msra.mxu0 0.0
        %1080 = vmatprep.subr.mxu0 0.0
        %1081 = vmatpush1.msra.mxu0 0.0
        %1082 = vmatprep.subr.mxu0 0.0
        %1083 = vmatpush1.msra.mxu0 0.0
        %1084 = vmatprep.subr.mxu0 0.0
        %1085 = vmatpush1.msra.mxu0 0.0
        %1086 = vmatprep.subr.mxu0 0.0
        %1087 = vmatpush1.msra.mxu0 0.0
        %1088 = vmatprep.subr.mxu0 0.0
        %1089 = vmatpush1.msra.mxu0 0.0
        %1090 = vmatprep.subr.mxu0 0.0
        %1091 = vmatpush1.msra.mxu0 0.0
        %1092 = vmatprep.subr.mxu0 0.0
        %1093 = vmatpush1.msra.mxu0 0.0
        %1094 = vmatprep.subr.mxu0 0.0
        %1095 = vmatpush1.msra.mxu0 0.0
        %1096 = vmatprep.mubr.f32.mxu0 0.0
        %1097 = vmatmul.mubr.f32.gmra.mrb[0].mxu0 %v1014
        %v1098 = vpop.f32.mrb[0].mxu0
        %v1099 = vadd.f32 %v1031, %v1098
        %v1100 = vpop.f32.mrb[0].mxu0
        %1101 = vdwg.mxu0
        %v1102 = vmul.f32 %v1099, 0.5
        %v1103 = vmul.f32 %v1099, 0.70710677
        %v1104 = verf.f32.pop %v1103
        %v1105 = vadd.f32 %v1104, 1.0
        %v1106 = vmul.f32 %v1102, %v1105
        %v1107 = vld [vmem:[#allocation10] sm:$0xff]
        %v1108 = vld [vmem:[#allocation10 + $0x8] sm:$0xff]
        %v1109 = vld [vmem:[#allocation10 + $0x10] sm:$0xff]
        %v1110 = vld [vmem:[#allocation10 + $0x18] sm:$0xff]
        %v1111 = vld [vmem:[#allocation10 + $0x20] sm:$0xff]
        %v1112 = vld [vmem:[#allocation10 + $0x28] sm:$0xff]
        %v1113 = vld [vmem:[#allocation10 + $0x30] sm:$0xff]
        %v1114 = vld [vmem:[#allocation10 + $0x38] sm:$0xff]
        %v1115 = vld [vmem:[#allocation10 + $0x40] sm:$0xff]
        %v1116 = vld [vmem:[#allocation10 + $0x48] sm:$0xff]
        %v1117 = vld [vmem:[#allocation10 + $0x50] sm:$0xff]
        %v1118 = vld [vmem:[#allocation10 + $0x58] sm:$0xff]
        %v1119 = vld [vmem:[#allocation10 + $0x60] sm:$0xff]
        %v1120 = vld [vmem:[#allocation10 + $0x68] sm:$0xff]
        %v1121 = vld [vmem:[#allocation10 + $0x70] sm:$0xff]
        %v1122 = vld [vmem:[#allocation10 + $0x78] sm:$0xff]
        %v1123 = vld [vmem:[#allocation10 + $0x80] sm:$0xff]
        %v1124 = vld [vmem:[#allocation10 + $0x88] sm:$0xff]
        %v1125 = vld [vmem:[#allocation10 + $0x90] sm:$0xff]
        %v1126 = vld [vmem:[#allocation10 + $0x98] sm:$0xff]
        %v1127 = vld [vmem:[#allocation10 + $0xa0] sm:$0xff]
        %v1128 = vld [vmem:[#allocation10 + $0xa8] sm:$0xff]
        %v1129 = vld [vmem:[#allocation10 + $0xb0] sm:$0xff]
        %v1130 = vld [vmem:[#allocation10 + $0xb8] sm:$0xff]
        %v1131 = vld [vmem:[#allocation10 + $0xc0] sm:$0xff]
        %v1132 = vld [vmem:[#allocation10 + $0xc8] sm:$0xff]
        %v1133 = vld [vmem:[#allocation10 + $0xd0] sm:$0xff]
        %v1134 = vld [vmem:[#allocation10 + $0xd8] sm:$0xff]
        %v1135 = vld [vmem:[#allocation10 + $0xe0] sm:$0xff]
        %v1136 = vld [vmem:[#allocation10 + $0xe8] sm:$0xff]
        %v1137 = vld [vmem:[#allocation10 + $0xf0] sm:$0xff]
        %v1138 = vld [vmem:[#allocation10 + $0xf8] sm:$0xff]
        %v1139 = vld [vmem:[#allocation10 + $0x100] sm:$0xff]
        %v1140 = vld [vmem:[#allocation10 + $0x108] sm:$0xff]
        %v1141 = vld [vmem:[#allocation10 + $0x110] sm:$0xff]
        %v1142 = vld [vmem:[#allocation10 + $0x118] sm:$0xff]
        %v1143 = vld [vmem:[#allocation10 + $0x120] sm:$0xff]
        %v1144 = vld [vmem:[#allocation10 + $0x128] sm:$0xff]
        %v1145 = vld [vmem:[#allocation10 + $0x130] sm:$0xff]
        %v1146 = vld [vmem:[#allocation10 + $0x138] sm:$0xff]
        %v1147 = vld [vmem:[#allocation10 + $0x140] sm:$0xff]
        %v1148 = vld [vmem:[#allocation10 + $0x148] sm:$0xff]
        %v1149 = vld [vmem:[#allocation10 + $0x150] sm:$0xff]
        %v1150 = vld [vmem:[#allocation10 + $0x158] sm:$0xff]
        %v1151 = vld [vmem:[#allocation10 + $0x160] sm:$0xff]
        %v1152 = vld [vmem:[#allocation10 + $0x168] sm:$0xff]
        %v1153 = vld [vmem:[#allocation10 + $0x170] sm:$0xff]
        %v1154 = vld [vmem:[#allocation10 + $0x178] sm:$0xff]
        %v1155 = vld [vmem:[%s7] sm:$0x7]
        %v1157 = vlaneseq
        %v1158 = vshrl.u32 %v1157, 7
        %v1159 = vsub.s32 0, %v1158
        %v1160 = vrot.slane %v1155, %v1159
        %v1161 = vlaneseq
        %v1162 = vshrl.u32 %v1161, 7
        %v1163 = vsub.s32 1, %v1162
        %v1164 = vrot.slane %v1155, %v1163
        %v1165 = vlaneseq
        %v1166 = vshrl.u32 %v1165, 7
        %v1167 = vsub.s32 2, %v1166
        %v1168 = vrot.slane %v1155, %v1167
        %1172 = vmatprep.subr.mxu0 %v1108
        %1173 = vmatpush1.msra.mxu0 %v1107
        %1174 = vmatprep.subr.mxu0 %v1111
        %1175 = vmatpush1.msra.mxu0 %v1110
        %1176 = vmatprep.subr.mxu0 %v1114
        %1177 = vmatpush1.msra.mxu0 %v1113
        %1178 = vmatprep.subr.mxu0 %v1117
        %1179 = vmatpush1.msra.mxu0 %v1116
        %1180 = vmatprep.subr.mxu0 %v1120
        %1181 = vmatpush1.msra.mxu0 %v1119
        %1182 = vmatprep.subr.mxu0 %v1123
        %1183 = vmatpush1.msra.mxu0 %v1122
        %1184 = vmatprep.subr.mxu0 %v1126
        %1185 = vmatpush1.msra.mxu0 %v1125
        %1186 = vmatprep.subr.mxu0 %v1129
        %1187 = vmatpush1.msra.mxu0 %v1128
        %1188 = vmatprep.subr.mxu0 %v1132
        %1189 = vmatpush1.msra.mxu0 %v1131
        %1190 = vmatprep.subr.mxu0 %v1135
        %1191 = vmatpush1.msra.mxu0 %v1134
        %1192 = vmatprep.subr.mxu0 %v1138
        %1193 = vmatpush1.msra.mxu0 %v1137
        %1194 = vmatprep.subr.mxu0 %v1141
        %1195 = vmatpush1.msra.mxu0 %v1140
        %1196 = vmatprep.subr.mxu0 %v1144
        %1197 = vmatpush1.msra.mxu0 %v1143
        %1198 = vmatprep.subr.mxu0 %v1147
        %1199 = vmatpush1.msra.mxu0 %v1146
        %1200 = vmatprep.subr.mxu0 %v1150
        %1201 = vmatpush1.msra.mxu0 %v1149
        %1202 = vmatprep.subr.mxu0 %v1153
        %1203 = vmatpush1.msra.mxu0 %v1152
        %1204 = vmatprep.subr.mxu0 0.0
        %1205 = vmatpush1.msra.mxu0 0.0
        %1206 = vmatprep.subr.mxu0 0.0
        %1207 = vmatpush1.msra.mxu0 0.0
        %1208 = vmatprep.subr.mxu0 0.0
        %1209 = vmatpush1.msra.mxu0 0.0
        %1210 = vmatprep.subr.mxu0 0.0
        %1211 = vmatpush1.msra.mxu0 0.0
        %1212 = vmatprep.subr.mxu0 0.0
        %1213 = vmatpush1.msra.mxu0 0.0
        %1214 = vmatprep.subr.mxu0 0.0
        %1215 = vmatpush1.msra.mxu0 0.0
        %1216 = vmatprep.subr.mxu0 0.0
        %1217 = vmatpush1.msra.mxu0 0.0
        %1218 = vmatprep.subr.mxu0 0.0
        %1219 = vmatpush1.msra.mxu0 0.0
        %1220 = vmatprep.subr.mxu0 0.0
        %1221 = vmatpush1.msra.mxu0 0.0
        %1222 = vmatprep.subr.mxu0 0.0
        %1223 = vmatpush1.msra.mxu0 0.0
        %1224 = vmatprep.subr.mxu0 0.0
        %1225 = vmatpush1.msra.mxu0 0.0
        %1226 = vmatprep.subr.mxu0 0.0
        %1227 = vmatpush1.msra.mxu0 0.0
        %1228 = vmatprep.subr.mxu0 0.0
        %1229 = vmatpush1.msra.mxu0 0.0
        %1230 = vmatprep.subr.mxu0 0.0
        %1231 = vmatpush1.msra.mxu0 0.0
        %1232 = vmatprep.subr.mxu0 0.0
        %1233 = vmatpush1.msra.mxu0 0.0
        %1234 = vmatprep.subr.mxu0 0.0
        %1235 = vmatpush1.msra.mxu0 0.0
        %1236 = vmatprep.mubr.f32.mxu0 0.0
        %1237 = vmatmul.mubr.f32.gmra.mrb[0].mxu0 %v1106
        %v1238 = vpop.f32.mrb[0].mxu0
        %v1239 = vadd.f32 %v1160, %v1238
        %v1240 = vpop.f32.mrb[0].mxu0
        %v1241 = vadd.f32 %v1164, %v1240
        %1242 = vdwg.mxu0
        %1243 = vmatprep.subr.mxu0 0.0
        %1244 = vmatpush1.msra.mxu0 %v1109
        %1245 = vmatprep.subr.mxu0 0.0
        %1246 = vmatpush1.msra.mxu0 %v1112
        %1247 = vmatprep.subr.mxu0 0.0
        %1248 = vmatpush1.msra.mxu0 %v1115
        %1249 = vmatprep.subr.mxu0 0.0
        %1250 = vmatpush1.msra.mxu0 %v1118
        %1251 = vmatprep.subr.mxu0 0.0
        %1252 = vmatpush1.msra.mxu0 %v1121
        %1253 = vmatprep.subr.mxu0 0.0
        %1254 = vmatpush1.msra.mxu0 %v1124
        %1255 = vmatprep.subr.mxu0 0.0
        %1256 = vmatpush1.msra.mxu0 %v1127
        %1257 = vmatprep.subr.mxu0 0.0
        %1258 = vmatpush1.msra.mxu0 %v1130
        %1259 = vmatprep.subr.mxu0 0.0
        %1260 = vmatpush1.msra.mxu0 %v1133
        %1261 = vmatprep.subr.mxu0 0.0
        %1262 = vmatpush1.msra.mxu0 %v1136
        %1263 = vmatprep.subr.mxu0 0.0
        %1264 = vmatpush1.msra.mxu0 %v1139
        %1265 = vmatprep.subr.mxu0 0.0
        %1266 = vmatpush1.msra.mxu0 %v1142
        %1267 = vmatprep.subr.mxu0 0.0
        %1268 = vmatpush1.msra.mxu0 %v1145
        %1269 = vmatprep.subr.mxu0 0.0
        %1270 = vmatpush1.msra.mxu0 %v1148
        %1271 = vmatprep.subr.mxu0 0.0
        %1272 = vmatpush1.msra.mxu0 %v1151
        %1273 = vmatprep.subr.mxu0 0.0
        %1274 = vmatpush1.msra.mxu0 %v1154
        %1275 = vmatprep.subr.mxu0 0.0
        %1276 = vmatpush1.msra.mxu0 0.0
        %1277 = vmatprep.subr.mxu0 0.0
        %1278 = vmatpush1.msra.mxu0 0.0
        %1279 = vmatprep.subr.mxu0 0.0
        %1280 = vmatpush1.msra.mxu0 0.0
        %1281 = vmatprep.subr.mxu0 0.0
        %1282 = vmatpush1.msra.mxu0 0.0
        %1283 = vmatprep.subr.mxu0 0.0
        %1284 = vmatpush1.msra.mxu0 0.0
        %1285 = vmatprep.subr.mxu0 0.0
        %1286 = vmatpush1.msra.mxu0 0.0
        %1287 = vmatprep.subr.mxu0 0.0
        %1288 = vmatpush1.msra.mxu0 0.0
        %1289 = vmatprep.subr.mxu0 0.0
        %1290 = vmatpush1.msra.mxu0 0.0
        %1291 = vmatprep.subr.mxu0 0.0
        %1292 = vmatpush1.msra.mxu0 0.0
        %1293 = vmatprep.subr.mxu0 0.0
        %1294 = vmatpush1.msra.mxu0 0.0
        %1295 = vmatprep.subr.mxu0 0.0
        %1296 = vmatpush1.msra.mxu0 0.0
        %1297 = vmatprep.subr.mxu0 0.0
        %1298 = vmatpush1.msra.mxu0 0.0
        %1299 = vmatprep.subr.mxu0 0.0
        %1300 = vmatpush1.msra.mxu0 0.0
        %1301 = vmatprep.subr.mxu0 0.0
        %1302 = vmatpush1.msra.mxu0 0.0
        %1303 = vmatprep.subr.mxu0 0.0
        %1304 = vmatpush1.msra.mxu0 0.0
        %1305 = vmatprep.subr.mxu0 0.0
        %1306 = vmatpush1.msra.mxu0 0.0
        %1307 = vmatprep.mubr.f32.mxu0 0.0
        %1308 = vmatmul.mubr.f32.gmra.mrb[0].mxu0 %v1106
        %v1309 = vpop.f32.mrb[0].mxu0
        %v1310 = vadd.f32 %v1168, %v1309
        %v1311 = vpop.f32.mrb[0].mxu0
        %1312 = vdwg.mxu0
        %v1313 = vmax.f32 %v1239, %v1241
        %v1314 = vmax.f32 %v1313, %v1310
        %v1315 = vsub.f32 %v1239, %v1314
        %v1316 = vmul.f32 %v1315, 1.442695
        %v1317 = vpow.pop %v1316
        %v1318 = vsub.f32 %v1241, %v1314
        %v1319 = vmul.f32 %v1318, 1.442695
        %v1320 = vpow.pop %v1319
        %v1321 = vsub.f32 %v1310, %v1314
        %v1322 = vmul.f32 %v1321, 1.442695
        %v1323 = vpow.pop %v1322
        %v1324 = vadd.f32 %v1317, %v1320
        %v1325 = vadd.f32 %v1324, %v1323
        %v1326 = vrcp.pop %v1325
        %v1327 = vmul.f32 %v1324, %v1326
        %v1328 = vmul.f32 %v1323, %v1326
        %v1329 = vlaneseq
        %v1330 = vshrl.u32 %v1329, 7
        %v1331 = vsub.s32 0, %v1330
        %v1332 = vrot.slane %v1327, %v1331
        %v1333 = vmul.f32 %v763, %v1332
        %v1334 = vmul.f32 %v764, %v1332
        %v1335 = vmul.f32 %v765, %v1332
        %v1336 = vmul.f32 %v766, %v1332
        %v1337 = vmul.f32 %v767, %v1332
        %v1338 = vmul.f32 %v768, %v1332
        %v1339 = vmul.f32 %v769, %v1332
        %v1340 = vmul.f32 %v770, %v1332
        %v1341 = vmul.f32 %v771, %v1332
        %v1342 = vmul.f32 %v772, %v1332
        %v1343 = vmul.f32 %v773, %v1332
        %v1344 = vmul.f32 %v774, %v1332
        %v1345 = vmul.f32 %v775, %v1332
        %v1346 = vmul.f32 %v776, %v1332
        %v1347 = vmul.f32 %v777, %v1332
        %v1348 = vmul.f32 %v778, %v1332
        %v1349 = vlaneseq
        %v1350 = vshrl.u32 %v1349, 7
        %v1351 = vsub.s32 0, %v1350
        %v1352 = vrot.slane %v1328, %v1351
        %v1353 = vmul.f32 %v779, %v1352
        %v1354 = vmul.f32 %v780, %v1352
        %v1355 = vmul.f32 %v781, %v1352
        %v1356 = vmul.f32 %v782, %v1352
        %v1357 = vmul.f32 %v783, %v1352
        %v1358 = vmul.f32 %v784, %v1352
        %v1359 = vmul.f32 %v785, %v1352
        %v1360 = vmul.f32 %v786, %v1352
        %v1361 = vmul.f32 %v787, %v1352
        %v1362 = vmul.f32 %v788, %v1352
        %v1363 = vmul.f32 %v789, %v1352
        %v1364 = vmul.f32 %v790, %v1352
        %v1365 = vmul.f32 %v791, %v1352
        %v1366 = vmul.f32 %v792, %v1352
        %v1367 = vmul.f32 %v793, %v1352
        %v1368 = vmul.f32 %v794, %v1352
        %v1369 = vmul.f32 %v795, %v1327
        %v1370 = vmul.f32 %v796, %v1328
        %v1371 = vadd.f32 %v1369, %v1370
        %v1372 = vlaneseq
        %v1373 = vshrl.u32 %v1372, 7
        %v1374 = vsub.s32 0, %v1373
        %v1375 = vrot.slane %v1371, %v1374
        %1376 = vmatprep.subr.mxu0 0.0
        %1377 = vmatpush1.msra.mxu0 %v1333
        %1378 = vmatprep.subr.mxu0 0.0
        %1379 = vmatpush1.msra.mxu0 %v1334
        %1380 = vmatprep.subr.mxu0 0.0
        %1381 = vmatpush1.msra.mxu0 %v1335
        %1382 = vmatprep.subr.mxu0 0.0
        %1383 = vmatpush1.msra.mxu0 %v1336
        %1384 = vmatprep.subr.mxu0 0.0
        %1385 = vmatpush1.msra.mxu0 %v1337
        %1386 = vmatprep.subr.mxu0 0.0
        %1387 = vmatpush1.msra.mxu0 %v1338
        %1388 = vmatprep.subr.mxu0 0.0
        %1389 = vmatpush1.msra.mxu0 %v1339
        %1390 = vmatprep.subr.mxu0 0.0
        %1391 = vmatpush1.msra.mxu0 %v1340
        %1392 = vmatprep.subr.mxu0 0.0
        %1393 = vmatpush1.msra.mxu0 %v1341
        %1394 = vmatprep.subr.mxu0 0.0
        %1395 = vmatpush1.msra.mxu0 %v1342
        %1396 = vmatprep.subr.mxu0 0.0
        %1397 = vmatpush1.msra.mxu0 %v1343
        %1398 = vmatprep.subr.mxu0 0.0
        %1399 = vmatpush1.msra.mxu0 %v1344
        %1400 = vmatprep.subr.mxu0 0.0
        %1401 = vmatpush1.msra.mxu0 %v1345
        %1402 = vmatprep.subr.mxu0 0.0
        %1403 = vmatpush1.msra.mxu0 %v1346
        %1404 = vmatprep.subr.mxu0 0.0
        %1405 = vmatpush1.msra.mxu0 %v1347
        %1406 = vmatprep.subr.mxu0 0.0
        %1407 = vmatpush1.msra.mxu0 %v1348
        %1408 = vmatprep.subr.mxu0 0.0
        %1409 = vmatpush1.msra.mxu0 %v1353
        %1410 = vmatprep.subr.mxu0 0.0
        %1411 = vmatpush1.msra.mxu0 %v1354
        %1412 = vmatprep.subr.mxu0 0.0
        %1413 = vmatpush1.msra.mxu0 %v1355
        %1414 = vmatprep.subr.mxu0 0.0
        %1415 = vmatpush1.msra.mxu0 %v1356
        %1416 = vmatprep.subr.mxu0 0.0
        %1417 = vmatpush1.msra.mxu0 %v1357
        %1418 = vmatprep.subr.mxu0 0.0
        %1419 = vmatpush1.msra.mxu0 %v1358
        %1420 = vmatprep.subr.mxu0 0.0
        %1421 = vmatpush1.msra.mxu0 %v1359
        %1422 = vmatprep.subr.mxu0 0.0
        %1423 = vmatpush1.msra.mxu0 %v1360
        %1424 = vmatprep.subr.mxu0 0.0
        %1425 = vmatpush1.msra.mxu0 %v1361
        %1426 = vmatprep.subr.mxu0 0.0
        %1427 = vmatpush1.msra.mxu0 %v1362
        %1428 = vmatprep.subr.mxu0 0.0
        %1429 = vmatpush1.msra.mxu0 %v1363
        %1430 = vmatprep.subr.mxu0 0.0
        %1431 = vmatpush1.msra.mxu0 %v1364
        %1432 = vmatprep.subr.mxu0 0.0
        %1433 = vmatpush1.msra.mxu0 %v1365
        %1434 = vmatprep.subr.mxu0 0.0
        %1435 = vmatpush1.msra.mxu0 %v1366
        %1436 = vmatprep.subr.mxu0 0.0
        %1437 = vmatpush1.msra.mxu0 %v1367
        %1438 = vmatprep.subr.mxu0 0.0
        %1439 = vmatpush1.msra.mxu0 %v1368
        %1440 = vmatprep.mubr.f32.mxu0 %v380
        %1441 = vmatmul.mubr.f32.gmra.mrb[0].mxu0 %v755
        %v1442 = vpop.f32.mrb[0].mxu0
        %v1443 = vadd.f32 %v1375, %v1442
        %v1444 = vpop.f32.mrb[0].mxu0
        %1445 = vmatprep.mubr.f32.mxu0 %v381
        %1446 = vmatmul.mubr.f32.gmra.mrb[0].mxu0 %v756
        %v1447 = vpop.f32.mrb[0].mxu0
        %v1448 = vadd.f32 %v1375, %v1447
        %v1449 = vpop.f32.mrb[0].mxu0
        %1450 = vmatprep.mubr.f32.mxu0 %v382
        %1451 = vmatmul.mubr.f32.gmra.mrb[0].mxu0 %v757
        %v1452 = vpop.f32.mrb[0].mxu0
        %v1453 = vadd.f32 %v1375, %v1452
        %v1454 = vpop.f32.mrb[0].mxu0
        %1455 = vmatprep.mubr.f32.mxu0 %v383
        %1456 = vmatmul.mubr.f32.gmra.mrb[0].mxu0 %v758
        %v1457 = vpop.f32.mrb[0].mxu0
        %v1458 = vadd.f32 %v1375, %v1457
        %v1459 = vpop.f32.mrb[0].mxu0
        %1460 = vmatprep.mubr.f32.mxu0 %v384
        %1461 = vmatmul.mubr.f32.gmra.mrb[0].mxu0 %v759
        %v1462 = vpop.f32.mrb[0].mxu0
        %v1463 = vadd.f32 %v1375, %v1462
        %v1464 = vpop.f32.mrb[0].mxu0
        %1465 = vmatprep.mubr.f32.mxu0 %v385
        %1466 = vmatmul.mubr.f32.gmra.mrb[0].mxu0 %v760
        %v1467 = vpop.f32.mrb[0].mxu0
        %v1468 = vadd.f32 %v1375, %v1467
        %v1469 = vpop.f32.mrb[0].mxu0
        %1470 = vmatprep.mubr.f32.mxu0 %v386
        %1471 = vmatmul.mubr.f32.gmra.mrb[0].mxu0 %v761
        %v1472 = vpop.f32.mrb[0].mxu0
        %v1473 = vadd.f32 %v1375, %v1472
        %v1474 = vpop.f32.mrb[0].mxu0
        %1475 = vmatprep.mubr.f32.mxu0 %v387
        %1476 = vmatmul.mubr.f32.gmra.mrb[0].mxu0 %v762
        %v1477 = vpop.f32.mrb[0].mxu0
        %v1478 = vadd.f32 %v1375, %v1477
        %v1479 = vpop.f32.mrb[0].mxu0
        %1480 = vdwg.mxu0
        %v1481 = vld [vmem:[#allocation7 + $0x100] sm:$0xff]
        %v1482 = vld [vmem:[#allocation7 + $0x108] sm:$0xff]
        %v1483 = vld [vmem:[#allocation7 + $0x110] sm:$0xff]
        %v1484 = vld [vmem:[#allocation7 + $0x118] sm:$0xff]
        %v1485 = vld [vmem:[#allocation7 + $0x120] sm:$0xff]
        %v1486 = vld [vmem:[#allocation7 + $0x128] sm:$0xff]
        %v1487 = vld [vmem:[#allocation7 + $0x130] sm:$0xff]
        %v1488 = vld [vmem:[#allocation7 + $0x138] sm:$0xff]
        %v1489 = vld [vmem:[#allocation7 + $0x140] sm:$0xff]
        %v1490 = vld [vmem:[#allocation7 + $0x148] sm:$0xff]
        %v1491 = vld [vmem:[#allocation7 + $0x150] sm:$0xff]
        %v1492 = vld [vmem:[#allocation7 + $0x158] sm:$0xff]
        %v1493 = vld [vmem:[#allocation7 + $0x160] sm:$0xff]
        %v1494 = vld [vmem:[#allocation7 + $0x168] sm:$0xff]
        %v1495 = vld [vmem:[#allocation7 + $0x170] sm:$0xff]
        %v1496 = vld [vmem:[#allocation7 + $0x178] sm:$0xff]
        %v1497 = vlaneseq
        %v1498 = vshrl.u32 %v1497, 7
        %v1499 = vsub.s32 0, %v1498
        %v1500 = vrot.slane %v797, %v1499
        %1501 = vmatprep.subr.mxu0 0.0
        %1502 = vmatpush1.msra.mxu0 %v1481
        %1503 = vmatprep.subr.mxu0 0.0
        %1504 = vmatpush1.msra.mxu0 %v1482
        %1505 = vmatprep.subr.mxu0 0.0
        %1506 = vmatpush1.msra.mxu0 %v1483
        %1507 = vmatprep.subr.mxu0 0.0
        %1508 = vmatpush1.msra.mxu0 %v1484
        %1509 = vmatprep.subr.mxu0 0.0
        %1510 = vmatpush1.msra.mxu0 %v1485
        %1511 = vmatprep.subr.mxu0 0.0
        %1512 = vmatpush1.msra.mxu0 %v1486
        %1513 = vmatprep.subr.mxu0 0.0
        %1514 = vmatpush1.msra.mxu0 %v1487
        %1515 = vmatprep.subr.mxu0 0.0
        %1516 = vmatpush1.msra.mxu0 %v1488
        %1517 = vmatprep.subr.mxu0 0.0
        %1518 = vmatpush1.msra.mxu0 %v1489
        %1519 = vmatprep.subr.mxu0 0.0
        %1520 = vmatpush1.msra.mxu0 %v1490
        %1521 = vmatprep.subr.mxu0 0.0
        %1522 = vmatpush1.msra.mxu0 %v1491
        %1523 = vmatprep.subr.mxu0 0.0
        %1524 = vmatpush1.msra.mxu0 %v1492
        %1525 = vmatprep.subr.mxu0 0.0
        %1526 = vmatpush1.msra.mxu0 %v1493
        %1527 = vmatprep.subr.mxu0 0.0
        %1528 = vmatpush1.msra.mxu0 %v1494
        %1529 = vmatprep.subr.mxu0 0.0
        %1530 = vmatpush1.msra.mxu0 %v1495
        %1531 = vmatprep.subr.mxu0 0.0
        %1532 = vmatpush1.msra.mxu0 %v1496
        %1533 = vmatprep.subr.mxu0 0.0
        %1534 = vmatpush1.msra.mxu0 0.0
        %1535 = vmatprep.subr.mxu0 0.0
        %1536 = vmatpush1.msra.mxu0 0.0
        %1537 = vmatprep.subr.mxu0 0.0
        %1538 = vmatpush1.msra.mxu0 0.0
        %1539 = vmatprep.subr.mxu0 0.0
        %1540 = vmatpush1.msra.mxu0 0.0
        %1541 = vmatprep.subr.mxu0 0.0
        %1542 = vmatpush1.msra.mxu0 0.0
        %1543 = vmatprep.subr.mxu0 0.0
        %1544 = vmatpush1.msra.mxu0 0.0
        %1545 = vmatprep.subr.mxu0 0.0
        %1546 = vmatpush1.msra.mxu0 0.0
        %1547 = vmatprep.subr.mxu0 0.0
        %1548 = vmatpush1.msra.mxu0 0.0
        %1549 = vmatprep.subr.mxu0 0.0
        %1550 = vmatpush1.msra.mxu0 0.0
        %1551 = vmatprep.subr.mxu0 0.0
        %1552 = vmatpush1.msra.mxu0 0.0
        %1553 = vmatprep.subr.mxu0 0.0
        %1554 = vmatpush1.msra.mxu0 0.0
        %1555 = vmatprep.subr.mxu0 0.0
        %1556 = vmatpush1.msra.mxu0 0.0
        %1557 = vmatprep.subr.mxu0 0.0
        %1558 = vmatpush1.msra.mxu0 0.0
        %1559 = vmatprep.subr.mxu0 0.0
        %1560 = vmatpush1.msra.mxu0 0.0
        %1561 = vmatprep.subr.mxu0 0.0
        %1562 = vmatpush1.msra.mxu0 0.0
        %1563 = vmatprep.subr.mxu0 0.0
        %1564 = vmatpush1.msra.mxu0 0.0
        %1565 = vmatprep.mubr.f32.mxu0 0.0
        %1566 = vmatmul.mubr.f32.gmra.mrb[0].mxu0 %v1443
        %v1567 = vpop.f32.mrb[0].mxu0
        %v1568 = vadd.f32 %v1500, %v1567
        %v1569 = vpop.f32.mrb[0].mxu0
        %1570 = vmatprep.mubr.f32.mxu0 0.0
        %1571 = vmatmul.mubr.f32.gmra.mrb[0].mxu0 %v1448
        %v1572 = vpop.f32.mrb[0].mxu0
        %v1573 = vadd.f32 %v1500, %v1572
        %v1574 = vpop.f32.mrb[0].mxu0
        %1575 = vmatprep.mubr.f32.mxu0 0.0
        %1576 = vmatmul.mubr.f32.gmra.mrb[0].mxu0 %v1453
        %v1577 = vpop.f32.mrb[0].mxu0
        %v1578 = vadd.f32 %v1500, %v1577
        %v1579 = vpop.f32.mrb[0].mxu0
        %1580 = vmatprep.mubr.f32.mxu0 0.0
        %1581 = vmatmul.mubr.f32.gmra.mrb[0].mxu0 %v1458
        %v1582 = vpop.f32.mrb[0].mxu0
        %v1583 = vadd.f32 %v1500, %v1582
        %v1584 = vpop.f32.mrb[0].mxu0
        %1585 = vmatprep.mubr.f32.mxu0 0.0
        %1586 = vmatmul.mubr.f32.gmra.mrb[0].mxu0 %v1463
        %v1587 = vpop.f32.mrb[0].mxu0
        %v1588 = vadd.f32 %v1500, %v1587
        %v1589 = vpop.f32.mrb[0].mxu0
        %1590 = vmatprep.mubr.f32.mxu0 0.0
        %1591 = vmatmul.mubr.f32.gmra.mrb[0].mxu0 %v1468
        %v1592 = vpop.f32.mrb[0].mxu0
        %v1593 = vadd.f32 %v1500, %v1592
        %v1594 = vpop.f32.mrb[0].mxu0
        %1595 = vmatprep.mubr.f32.mxu0 0.0
        %1596 = vmatmul.mubr.f32.gmra.mrb[0].mxu0 %v1473
        %v1597 = vpop.f32.mrb[0].mxu0
        %v1598 = vadd.f32 %v1500, %v1597
        %v1599 = vpop.f32.mrb[0].mxu0
        %1600 = vmatprep.mubr.f32.mxu0 0.0
        %1601 = vmatmul.mubr.f32.gmra.mrb[0].mxu0 %v1478
        %v1602 = vpop.f32.mrb[0].mxu0
        %v1603 = vadd.f32 %v1500, %v1602
        %v1604 = vpop.f32.mrb[0].mxu0
        %1605 = vdwg.mxu0
        %1606 = vst [vmem:[%s379] sm:$0xff] %v1568
        %1607 = vst [vmem:[%s379 + $0x8] sm:$0xff] %v1573
        %1608 = vst [vmem:[%s379 + $0x10] sm:$0xff] %v1578
        %1609 = vst [vmem:[%s379 + $0x18] sm:$0xff] %v1583
        %1610 = vst [vmem:[%s379 + $0x20] sm:$0xff] %v1588
        %1611 = vst [vmem:[%s379 + $0x28] sm:$0xff] %v1593
        %1612 = vst [vmem:[%s379 + $0x30] sm:$0xff] %v1598
        %1613 = vst [vmem:[%s379 + $0x38] sm:$0xff] %v1603
        %s1614 = sand.u32 %s208, 1
        %s1615 = scalar_lea.sflag [#allocation4], %s1614
        %s1616 = sand.u32 %s208, 1
        %s1617 = smul.addr %s1616, 64
        %s1618 = scalar_lea.vmem [#allocation11], %s1617
        // Predicated region
        $region73: #{tpu_custom_call.1} parent=51 // pred_check
          %p1619 = pneg %p218
        $region74: #{tpu_custom_call.1} parent=51 // pred_check_branch
          %1621 = sbr.rel (%p1619) target = $region76
        $region75: #{tpu_custom_call.1} parent=51 // pred_region
          %s1623 = ssub.s32 1024, 1024
          %1624 = vsyncadd %s1615, %s1623
          %s1625 = smul.addr %s27, 8
          %s1626 = smul.addr %s1625, 128
          %s1627 = scalar_lea.hbm %s8, %s1626
          %s1628 = sshll.u32 %s1618, 4
          %s1629 = int_to_ptr.vmem [resolvable:$true] %s1628
          %1634 = dma.vmem_to_hbm [thread:$0]  %s1629, 1024, %s1627, %s1615, 128, 128, 8
        $region76: #{tpu_custom_call.1} parent=51 // pred_fallthru
          _
      $region52: #{tpu_custom_call.1} parent=5 // pred_fallthru
        _
      %p1635 = scmp.le.s32.totalorder 2, %s22
      // Predicated region
      $region77: #{tpu_custom_call.1} parent=5 // pred_check
        %p1636 = pneg %p1635
      $region78: #{tpu_custom_call.1} parent=5 // pred_check_branch
        %1638 = sbr.rel (%p1636) target = $region80
      $region79: #{tpu_custom_call.1} parent=5 // pred_region
        %s1639 = ssub.s32 %s22, 2
        // Predicated region
        $region81: #{tpu_custom_call.1} parent=79 // pred_check
          %p1640 = pneg %p224
        $region82: #{tpu_custom_call.1} parent=79 // pred_check_branch
          %1642 = sbr.rel (%p1640) target = $region84
        $region83: #{tpu_custom_call.1} parent=79 // pred_region
          %s1643 = sand.u32 %s209, 1
          %s1644 = scalar_lea.sflag [#allocation4], %s1643
          %s1645 = sand.u32 %s209, 1
          %s1646 = smul.addr %s1645, 64
          %s1647 = scalar_lea.vmem [#allocation11], %s1646
          %1648 = dma.done %s1644, 1024
        $region84: #{tpu_custom_call.1} parent=79 // pred_fallthru
          _
      $region80: #{tpu_custom_call.1} parent=5 // pred_fallthru
        _
    $region6: #{tpu_custom_call.1} parent=1 // loop_footer
      %s26 = sadd.s32 1, %s22
    $region7: #{tpu_custom_call.1} parent=1 // loop_footer_branch
      %21 = sbr.rel target = $region3
    $region8: #{tpu_custom_call.1} parent=1 // loop_exit
      _
    %1649 = vsyncpa [#allocation3], 1
    %s1650 = scalar_lea.sflag [#allocation3], 1
    %1651 = vsyncpa %s1650, 1
    %1652 = vsyncpa [#allocation6], 1
    %1653 = vsyncpa [#allocation9], 1
    %1654 = vsyncpa [#allocation4], 1
    %s1655 = scalar_lea.sflag [#allocation4], 1
    %1656 = vsyncpa %s1655, 1

</llo_original>
